<compile_context>
chip_gen: v5e
topology: v5e:2x2
jax: 0.10.0
libtpu: 0.0.40
codegen_flags: <defaults>
</compile_context>

<pallas_src>
import functools
import math

import jax
import jax.numpy as jnp
import numpy as np
from jax.experimental import pallas as pl
from jax.experimental.pallas import tpu as pltpu


def _layer_norm(z, gamma, beta, eps=1e-5):
    mu = jnp.mean(z, axis=-1, keepdims=True)
    var = jnp.mean((z - mu) ** 2, axis=-1, keepdims=True)
    return (z - mu) * jax.lax.rsqrt(var + eps) * gamma + beta


def encoder_kernel(
    x_ref,
    wq_ref, bq_ref, wk_ref, bk_ref, wv_ref, bv_ref, wo_ref, bo_ref,
    g1_ref, be1_ref,
    w1_ref, b1_ref, w2_ref, b2_ref,
    g2_ref, be2_ref,
    y_ref, attn_ref,
    *, n_heads: int, matmul_dtype,
):
    TB, S, D = x_ref.shape
    H = n_heads
    dk = D // H
    scale = 1.0 / math.sqrt(dk)
    md = matmul_dtype
    f32 = jnp.float32

    x3 = x_ref[...]                          # (TB, S, D)
    x2 = x3.reshape(TB * S, D)               # residual / FFN path (rows folded)

    # ---- Multi-head self-attention: all heads in batched contractions ------
    # Flatten (batch, head) into one leading batch axis; only leading-dim
    # broadcasts / reshapes are used (no transposes, no lane slicing).
    xb = jnp.broadcast_to(x3[:, None], (TB, H, S, D)).reshape(TB * H, S, D)
    xb = xb.astype(md)

    def per_bh(a):                           # (H, ...) -> (TB*H, ...)
        return jnp.broadcast_to(a[None], (TB,) + a.shape).reshape(
            (TB * H,) + a.shape[1:])

    wq = per_bh(wq_ref[...].astype(md))      # (TB*H, D, dk)
    wk = per_bh(wk_ref[...].astype(md))
    wv = per_bh(wv_ref[...].astype(md))
    wo = per_bh(wo_ref[...].astype(md))      # (TB*H, dk, D)
    bq = per_bh(bq_ref[...])                 # (TB*H, 1, dk), kept f32
    bk = per_bh(bk_ref[...])
    bv = per_bh(bv_ref[...])

    # Scale folded into q once (instead of scaling every (S,S) score tile).
    q = (jnp.einsum("bnd,bdk->bnk", xb, wq, preferred_element_type=f32) + bq) * scale
    k = jnp.einsum("bnd,bdk->bnk", xb, wk, preferred_element_type=f32) + bk
    v = jnp.einsum("bnd,bdk->bnk", xb, wv, preferred_element_type=f32) + bv

    s = jnp.einsum("bqd,bkd->bqk", q.astype(md), k.astype(md),
                   preferred_element_type=f32)           # (TB*H, S, S)
    s = s - jnp.max(s, axis=-1, keepdims=True)
    e = jnp.exp(s)                                       # EUP
    denom = jnp.sum(e, axis=-1, keepdims=True)
    inv = pl.reciprocal(denom, approx=True)              # EUP slot (no VALU divide)
    inv = inv * (2.0 - denom * inv)                      # one Newton step -> ~f32 exact
    a = e * inv                                          # softmax weights (f32)

    # One slab store of the attention weights per grid step.
    attn_ref[...] = a.reshape(TB, H, S, S)

    ctx = jnp.einsum("bqk,bkd->bqd", a.astype(md), v.astype(md),
                     preferred_element_type=f32)         # (TB*H, S, dk)
    mha_h = jnp.einsum("bqd,bde->bqe", ctx.astype(md), wo,
                       preferred_element_type=f32)       # (TB*H, S, D)
    # Sum over heads (leading, untiled dim) replaces the concatenate + Wo dot.
    mha = jnp.sum(mha_h.reshape(TB, H, S, D), axis=1).reshape(TB * S, D)
    mha = mha + bo_ref[...]

    # ---- dropout_1 (identity) + AddNorm 1 -----------------------------------
    x1 = _layer_norm(x2 + mha, g1_ref[...], be1_ref[...])

    # ---- Position-wise FFN ---------------------------------------------------
    h1 = jnp.dot(x1.astype(md), w1_ref[...].astype(md),
                 preferred_element_type=f32) + b1_ref[...]
    h1 = jnp.maximum(h1, 0.0)                             # ReLU
    ff = jnp.dot(h1.astype(md), w2_ref[...].astype(md),
                 preferred_element_type=f32) + b2_ref[...]

    # ---- dropout_2 (identity) + AddNorm 2 -----------------------------------
    y = _layer_norm(x1 + ff, g2_ref[...], be2_ref[...])
    y_ref[...] = y.reshape(TB, S, D)


def transformer_encoder(x, params, n_heads, *, batch_block=None,
                        matmul_dtype=jnp.float32):
    B, S, D = x.shape
    H = n_heads
    assert D % H == 0
    dk = D // H
    F = params["w1"].shape[1]

    if batch_block is None:
        # Keep >= 2 grid steps when possible (v7x has 2 TensorCores and the
        # grid axis is marked "parallel"); otherwise fold all batches into one
        # step so per-step overhead isn't paid B times.
        batch_block = B // 2 if (B >= 2 and B % 2 == 0) else B
    assert B % batch_block == 0
    TB = batch_block

    # Head-major weight layouts, prepared once outside the kernel.
    def head_w(w):   # (D, D) -> (H, D, dk)
        return w.reshape(D, H, dk).transpose(1, 0, 2)

    def head_b(b):   # (1, D) -> (H, 1, dk)
        return b.reshape(H, dk)[:, None, :]

    wq_h, wk_h, wv_h = head_w(params["wq"]), head_w(params["wk"]), head_w(params["wv"])
    bq_h, bk_h, bv_h = head_b(params["bq"]), head_b(params["bk"]), head_b(params["bv"])
    wo_h = params["wo"].reshape(H, dk, D)

    def full(shape):
        nd = len(shape)
        return pl.BlockSpec(shape, lambda b, _nd=nd: (0,) * _nd)

    in_specs = [
        pl.BlockSpec((TB, S, D), lambda b: (b, 0, 0)),   # x
        full((H, D, dk)), full((H, 1, dk)),              # Wq, bq (head-major)
        full((H, D, dk)), full((H, 1, dk)),              # Wk, bk
        full((H, D, dk)), full((H, 1, dk)),              # Wv, bv
        full((H, dk, D)), full((1, D)),                  # Wo (head-major), bo
        full((1, D)), full((1, D)),                      # ln1 gamma, beta
        full((D, F)), full((1, F)),                      # W1, b1
        full((F, D)), full((1, D)),                      # W2, b2
        full((1, D)), full((1, D)),                      # ln2 gamma, beta
    ]
    out_specs = (
        pl.BlockSpec((TB, S, D), lambda b: (b, 0, 0)),
        pl.BlockSpec((TB, H, S, S), lambda b: (b, 0, 0, 0)),
    )
    out_shape = (
        jax.ShapeDtypeStruct((B, S, D), jnp.float32),
        jax.ShapeDtypeStruct((B, H, S, S), jnp.float32),
    )

    kernel = functools.partial(encoder_kernel, n_heads=n_heads,
                               matmul_dtype=matmul_dtype)
    return pl.pallas_call(
        kernel,
        grid=(B // TB,),
        in_specs=in_specs,
        out_specs=out_specs,
        out_shape=out_shape,
        compiler_params=pltpu.CompilerParams(
            dimension_semantics=("parallel",),
        ),
    )(
        x,
        wq_h, bq_h, wk_h, bk_h, wv_h, bv_h, wo_h, params["bo"],
        params["g1"], params["be1"],
        params["w1"], params["b1"], params["w2"], params["b2"],
        params["g2"], params["be2"],
    )


def transformer_encoder_ref(x, p, n_heads):
    """Pure-JAX reference for correctness checking."""
    B, S, D = x.shape
    dk = D // n_heads
    q = x @ p["wq"] + p["bq"]
    k = x @ p["wk"] + p["bk"]
    v = x @ p["wv"] + p["bv"]

    def split(t):  # (B,S,D) -> (B,H,S,dk)
        return t.reshape(B, S, n_heads, dk).transpose(0, 2, 1, 3)

    qh, kh, vh = split(q), split(k), split(v)
    scores = jnp.einsum("bhqd,bhkd->bhqk", qh, kh) / math.sqrt(dk)
    attn = jax.nn.softmax(scores, axis=-1)
    ctx = jnp.einsum("bhqk,bhkd->bhqd", attn, vh)
    ctx = ctx.transpose(0, 2, 1, 3).reshape(B, S, D)
    mha = ctx @ p["wo"] + p["bo"]

    def ln(z, g, b):
        mu = jnp.mean(z, -1, keepdims=True)
        var = jnp.mean((z - mu) ** 2, -1, keepdims=True)
        return (z - mu) * jax.lax.rsqrt(var + 1e-5) * g + b

    x1 = ln(x + mha, p["g1"], p["be1"])
    ff = jnp.maximum(x1 @ p["w1"] + p["b1"], 0.0) @ p["w2"] + p["b2"]
    return ln(x1 + ff, p["g2"], p["be2"]), attn


if __name__ == "__main__":
    # Small shapes consistent with the module's forward:
    B, S, D = 2, 8, 32        # batch, sen_len, d_model
    H = 4                     # n_blocks -> number of attention heads
    F = 64                    # inner_dim of PositionWiseFFN

    key = jax.random.PRNGKey(0)
    keys = jax.random.split(key, 16)

    def w(k, shape, scale=0.05):
        return (scale * jax.random.normal(k, shape)).astype(jnp.float32)

    params = {
        "wq": w(keys[0], (D, D)), "bq": w(keys[1], (1, D)),
        "wk": w(keys[2], (D, D)), "bk": w(keys[3], (1, D)),
        "wv": w(keys[4], (D, D)), "bv": w(keys[5], (1, D)),
        "wo": w(keys[6], (D, D)), "bo": w(keys[7], (1, D)),
        "g1": jnp.ones((1, D), jnp.float32), "be1": jnp.zeros((1, D), jnp.float32),
        "w1": w(keys[8], (D, F)), "b1": w(keys[9], (1, F)),
        "w2": w(keys[10], (F, D)), "b2": w(keys[11], (1, D)),
        "g2": jnp.ones((1, D), jnp.float32), "be2": jnp.zeros((1, D), jnp.float32),
    }

    x = jax.random.normal(keys[12], (B, S, D), dtype=jnp.float32)

    # f32 MXU path here so the check stays tight; pass matmul_dtype=jnp.bfloat16
    # on v6e/v7x for the bf16 MXU (with looser tolerance).
    y, attn = transformer_encoder(x, params, H)
    jax.block_until_ready((y, attn))

    y_ref, attn_ref = transformer_encoder_ref(x, params, H)
    np.testing.assert_allclose(np.asarray(y), np.asarray(y_ref), rtol=1e-3, atol=1e-3)
    np.testing.assert_allclose(np.asarray(attn), np.asarray(attn_ref), rtol=1e-3, atol=1e-3)

    print("KERNEL_OK")
</pallas_src>

<mosaic_0001>
module attributes {stable_mosaic.version = 11 : i64} {
  func.func @encoder_kernel(%arg0: i32, %arg1: memref<1x8x32xf32, #tpu.memory_space<vmem>>, %arg2: memref<4x32x8xf32, #tpu.memory_space<vmem>>, %arg3: memref<4x1x8xf32, #tpu.memory_space<vmem>>, %arg4: memref<4x32x8xf32, #tpu.memory_space<vmem>>, %arg5: memref<4x1x8xf32, #tpu.memory_space<vmem>>, %arg6: memref<4x32x8xf32, #tpu.memory_space<vmem>>, %arg7: memref<4x1x8xf32, #tpu.memory_space<vmem>>, %arg8: memref<4x8x32xf32, #tpu.memory_space<vmem>>, %arg9: memref<1x32xf32, #tpu.memory_space<vmem>>, %arg10: memref<1x32xf32, #tpu.memory_space<vmem>>, %arg11: memref<1x32xf32, #tpu.memory_space<vmem>>, %arg12: memref<32x64xf32, #tpu.memory_space<vmem>>, %arg13: memref<1x64xf32, #tpu.memory_space<vmem>>, %arg14: memref<64x32xf32, #tpu.memory_space<vmem>>, %arg15: memref<1x32xf32, #tpu.memory_space<vmem>>, %arg16: memref<1x32xf32, #tpu.memory_space<vmem>>, %arg17: memref<1x32xf32, #tpu.memory_space<vmem>>, %arg18: memref<1x8x32xf32, #tpu.memory_space<vmem>>, %arg19: memref<1x4x8x8xf32, #tpu.memory_space<vmem>>) attributes {dimension_semantics = [#tpu.dimension_semantics<parallel>], iteration_bounds = array<i64: 2>, scalar_prefetch = 0 : i64, scratch_operands = 0 : i64, tpu.core_type = #tpu.core_type<tc>, window_params = [{transform_indices = @transform_0, window_bounds = array<i64: 1, 8, 32>}, {pipeline_mode = #tpu.pipeline_mode<synchronous>, transform_indices = @transform_1, window_bounds = array<i64: 4, 32, 8>}, {pipeline_mode = #tpu.pipeline_mode<synchronous>, transform_indices = @transform_2, window_bounds = array<i64: 4, 1, 8>}, {pipeline_mode = #tpu.pipeline_mode<synchronous>, transform_indices = @transform_3, window_bounds = array<i64: 4, 32, 8>}, {pipeline_mode = #tpu.pipeline_mode<synchronous>, transform_indices = @transform_4, window_bounds = array<i64: 4, 1, 8>}, {pipeline_mode = #tpu.pipeline_mode<synchronous>, transform_indices = @transform_5, window_bounds = array<i64: 4, 32, 8>}, {pipeline_mode = #tpu.pipeline_mode<synchronous>, transform_indices = @transform_6, window_bounds = array<i64: 4, 1, 8>}, {pipeline_mode = #tpu.pipeline_mode<synchronous>, transform_indices = @transform_7, window_bounds = array<i64: 4, 8, 32>}, {pipeline_mode = #tpu.pipeline_mode<synchronous>, transform_indices = @transform_8, window_bounds = array<i64: 1, 32>}, {pipeline_mode = #tpu.pipeline_mode<synchronous>, transform_indices = @transform_9, window_bounds = array<i64: 1, 32>}, {pipeline_mode = #tpu.pipeline_mode<synchronous>, transform_indices = @transform_10, window_bounds = array<i64: 1, 32>}, {pipeline_mode = #tpu.pipeline_mode<synchronous>, transform_indices = @transform_11, window_bounds = array<i64: 32, 64>}, {pipeline_mode = #tpu.pipeline_mode<synchronous>, transform_indices = @transform_12, window_bounds = array<i64: 1, 64>}, {pipeline_mode = #tpu.pipeline_mode<synchronous>, transform_indices = @transform_13, window_bounds = array<i64: 64, 32>}, {pipeline_mode = #tpu.pipeline_mode<synchronous>, transform_indices = @transform_14, window_bounds = array<i64: 1, 32>}, {pipeline_mode = #tpu.pipeline_mode<synchronous>, transform_indices = @transform_15, window_bounds = array<i64: 1, 32>}, {pipeline_mode = #tpu.pipeline_mode<synchronous>, transform_indices = @transform_16, window_bounds = array<i64: 1, 32>}, {transform_indices = @transform_17, window_bounds = array<i64: 1, 8, 32>}, {transform_indices = @transform_18, window_bounds = array<i64: 1, 4, 8, 8>}]} {
    %c0 = arith.constant 0 : index
    %c0_0 = arith.constant 0 : index
    %c0_1 = arith.constant 0 : index
    %0 = vector.load %arg1[%c0, %c0_0, %c0_1] : memref<1x8x32xf32, #tpu.memory_space<vmem>>, vector<1x8x32xf32>
    %1 = vector.shape_cast %0 : vector<1x8x32xf32> to vector<8x32xf32>
    %2 = vector.shape_cast %0 : vector<1x8x32xf32> to vector<1x1x8x32xf32>
    %3 = vector.shape_cast %2 : vector<1x1x8x32xf32> to vector<1x1x8x32xf32>
    %4 = vector.broadcast %3 : vector<1x1x8x32xf32> to vector<1x4x8x32xf32>
    %5 = vector.shape_cast %4 : vector<1x4x8x32xf32> to vector<4x8x32xf32>
    %c0_2 = arith.constant 0 : index
    %c0_3 = arith.constant 0 : index
    %c0_4 = arith.constant 0 : index
    %6 = vector.load %arg2[%c0_2, %c0_3, %c0_4] : memref<4x32x8xf32, #tpu.memory_space<vmem>>, vector<4x32x8xf32>
    %7 = vector.shape_cast %6 : vector<4x32x8xf32> to vector<1x4x32x8xf32>
    %8 = vector.shape_cast %7 : vector<1x4x32x8xf32> to vector<4x32x8xf32>
    %c0_5 = arith.constant 0 : index
    %c0_6 = arith.constant 0 : index
    %c0_7 = arith.constant 0 : index
    %9 = vector.load %arg4[%c0_5, %c0_6, %c0_7] : memref<4x32x8xf32, #tpu.memory_space<vmem>>, vector<4x32x8xf32>
    %10 = vector.shape_cast %9 : vector<4x32x8xf32> to vector<1x4x32x8xf32>
    %11 = vector.shape_cast %10 : vector<1x4x32x8xf32> to vector<4x32x8xf32>
    %c0_8 = arith.constant 0 : index
    %c0_9 = arith.constant 0 : index
    %c0_10 = arith.constant 0 : index
    %12 = vector.load %arg6[%c0_8, %c0_9, %c0_10] : memref<4x32x8xf32, #tpu.memory_space<vmem>>, vector<4x32x8xf32>
    %13 = vector.shape_cast %12 : vector<4x32x8xf32> to vector<1x4x32x8xf32>
    %14 = vector.shape_cast %13 : vector<1x4x32x8xf32> to vector<4x32x8xf32>
    %c0_11 = arith.constant 0 : index
    %c0_12 = arith.constant 0 : index
    %c0_13 = arith.constant 0 : index
    %15 = vector.load %arg8[%c0_11, %c0_12, %c0_13] : memref<4x8x32xf32, #tpu.memory_space<vmem>>, vector<4x8x32xf32>
    %16 = vector.shape_cast %15 : vector<4x8x32xf32> to vector<1x4x8x32xf32>
    %17 = vector.shape_cast %16 : vector<1x4x8x32xf32> to vector<4x8x32xf32>
    %c0_14 = arith.constant 0 : index
    %c0_15 = arith.constant 0 : index
    %c0_16 = arith.constant 0 : index
    %18 = vector.load %arg3[%c0_14, %c0_15, %c0_16] : memref<4x1x8xf32, #tpu.memory_space<vmem>>, vector<4x1x8xf32>
    %19 = vector.shape_cast %18 : vector<4x1x8xf32> to vector<1x4x1x8xf32>
    %20 = vector.shape_cast %19 : vector<1x4x1x8xf32> to vector<4x1x8xf32>
    %c0_17 = arith.constant 0 : index
    %c0_18 = arith.constant 0 : index
    %c0_19 = arith.constant 0 : index
    %21 = vector.load %arg5[%c0_17, %c0_18, %c0_19] : memref<4x1x8xf32, #tpu.memory_space<vmem>>, vector<4x1x8xf32>
    %22 = vector.shape_cast %21 : vector<4x1x8xf32> to vector<1x4x1x8xf32>
    %23 = vector.shape_cast %22 : vector<1x4x1x8xf32> to vector<4x1x8xf32>
    %c0_20 = arith.constant 0 : index
    %c0_21 = arith.constant 0 : index
    %c0_22 = arith.constant 0 : index
    %24 = vector.load %arg7[%c0_20, %c0_21, %c0_22] : memref<4x1x8xf32, #tpu.memory_space<vmem>>, vector<4x1x8xf32>
    %25 = vector.shape_cast %24 : vector<4x1x8xf32> to vector<1x4x1x8xf32>
    %26 = vector.shape_cast %25 : vector<1x4x1x8xf32> to vector<4x1x8xf32>
    "tpu.trace_start"() <{level = 10 : i32, message = "bnd,bdk->bnk"}> : () -> ()
    %cst = arith.constant dense<0.000000e+00> : vector<4x8x8xf32>
    %27 = tpu.matmul %5, %8, %cst {dimension_numbers = #tpu.dot_dimension_numbers<[2], [1], [1], [2], [0, 0, 0, 1, 1, 2], [0], [0]>} : vector<4x8x32xf32>, vector<4x32x8xf32>, vector<4x8x8xf32> -> vector<4x8x8xf32>
    "tpu.trace_stop"() : () -> ()
    %28 = vector.broadcast %20 : vector<4x1x8xf32> to vector<4x8x8xf32>
    %29 = arith.addf %27, %28 : vector<4x8x8xf32>
    %cst_23 = arith.constant 0.353553385 : f32
    %30 = vector.broadcast %cst_23 : f32 to vector<4x8x8xf32>
    %31 = arith.mulf %29, %30 : vector<4x8x8xf32>
    "tpu.trace_start"() <{level = 10 : i32, message = "bnd,bdk->bnk"}> : () -> ()
    %cst_24 = arith.constant dense<0.000000e+00> : vector<4x8x8xf32>
    %32 = tpu.matmul %5, %11, %cst_24 {dimension_numbers = #tpu.dot_dimension_numbers<[2], [1], [1], [2], [0, 0, 0, 1, 1, 2], [0], [0]>} : vector<4x8x32xf32>, vector<4x32x8xf32>, vector<4x8x8xf32> -> vector<4x8x8xf32>
    "tpu.trace_stop"() : () -> ()
    %33 = vector.broadcast %23 : vector<4x1x8xf32> to vector<4x8x8xf32>
    %34 = arith.addf %32, %33 : vector<4x8x8xf32>
    "tpu.trace_start"() <{level = 10 : i32, message = "bnd,bdk->bnk"}> : () -> ()
    %cst_25 = arith.constant dense<0.000000e+00> : vector<4x8x8xf32>
    %35 = tpu.matmul %5, %14, %cst_25 {dimension_numbers = #tpu.dot_dimension_numbers<[2], [1], [1], [2], [0, 0, 0, 1, 1, 2], [0], [0]>} : vector<4x8x32xf32>, vector<4x32x8xf32>, vector<4x8x8xf32> -> vector<4x8x8xf32>
    "tpu.trace_stop"() : () -> ()
    %36 = vector.broadcast %26 : vector<4x1x8xf32> to vector<4x8x8xf32>
    %37 = arith.addf %35, %36 : vector<4x8x8xf32>
    "tpu.trace_start"() <{level = 10 : i32, message = "bqd,bkd->bqk"}> : () -> ()
    %cst_26 = arith.constant dense<0.000000e+00> : vector<4x8x8xf32>
    %38 = tpu.matmul %31, %34, %cst_26 {dimension_numbers = #tpu.dot_dimension_numbers<[2], [2], [1], [1], [0, 0, 0, 1, 1, 1], [0], [0]>} : vector<4x8x8xf32>, vector<4x8x8xf32>, vector<4x8x8xf32> -> vector<4x8x8xf32>
    "tpu.trace_stop"() : () -> ()
    %cst_27 = arith.constant dense<0xFF800000> : vector<4x8xf32>
    %39 = vector.multi_reduction <maximumf>, %38, %cst_27 [2] : vector<4x8x8xf32> to vector<4x8xf32>
    %40 = vector.shape_cast %39 : vector<4x8xf32> to vector<4x8x1xf32>
    %41 = vector.broadcast %40 : vector<4x8x1xf32> to vector<4x8x8xf32>
    %42 = arith.subf %38, %41 : vector<4x8x8xf32>
    %43 = math.exp %42 : vector<4x8x8xf32>
    %cst_28 = arith.constant dense<0.000000e+00> : vector<4x8xf32>
    %44 = vector.multi_reduction <add>, %43, %cst_28 [2] : vector<4x8x8xf32> to vector<4x8xf32>
    %45 = vector.shape_cast %44 : vector<4x8xf32> to vector<4x8x1xf32>
    %46 = tpu.reciprocal %45 {approx = true} : vector<4x8x1xf32> -> vector<4x8x1xf32>
    %47 = arith.mulf %45, %46 : vector<4x8x1xf32>
    %cst_29 = arith.constant 2.000000e+00 : f32
    %48 = vector.broadcast %cst_29 : f32 to vector<4x8x1xf32>
    %49 = arith.subf %48, %47 : vector<4x8x1xf32>
    %50 = arith.mulf %46, %49 : vector<4x8x1xf32>
    %51 = vector.broadcast %50 : vector<4x8x1xf32> to vector<4x8x8xf32>
    %52 = arith.mulf %43, %51 : vector<4x8x8xf32>
    %53 = vector.shape_cast %52 : vector<4x8x8xf32> to vector<1x4x8x8xf32>
    %c0_30 = arith.constant 0 : index
    %c0_31 = arith.constant 0 : index
    %c0_32 = arith.constant 0 : index
    %c0_33 = arith.constant 0 : index
    %54 = vector.load %arg19[%c0_30, %c0_31, %c0_32, %c0_33] : memref<1x4x8x8xf32, #tpu.memory_space<vmem>>, vector<1x4x8x8xf32>
    tpu.vector_store %arg19[%c0_30, %c0_31, %c0_32, %c0_33], %53 {strides = array<i32>} : memref<1x4x8x8xf32, #tpu.memory_space<vmem>>, vector<1x4x8x8xf32>,
    "tpu.trace_start"() <{level = 10 : i32, message = "bqk,bkd->bqd"}> : () -> ()
    %cst_34 = arith.constant dense<0.000000e+00> : vector<4x8x8xf32>
    %55 = tpu.matmul %52, %37, %cst_34 {dimension_numbers = #tpu.dot_dimension_numbers<[2], [1], [1], [2], [0, 0, 0, 1, 1, 2], [0], [0]>} : vector<4x8x8xf32>, vector<4x8x8xf32>, vector<4x8x8xf32> -> vector<4x8x8xf32>
    "tpu.trace_stop"() : () -> ()
    "tpu.trace_start"() <{level = 10 : i32, message = "bqd,bde->bqe"}> : () -> ()
    %cst_35 = arith.constant dense<0.000000e+00> : vector<4x8x32xf32>
    %56 = tpu.matmul %55, %17, %cst_35 {dimension_numbers = #tpu.dot_dimension_numbers<[2], [1], [1], [2], [0, 0, 0, 1, 1, 2], [0], [0]>} : vector<4x8x8xf32>, vector<4x8x32xf32>, vector<4x8x32xf32> -> vector<4x8x32xf32>
    "tpu.trace_stop"() : () -> ()
    %57 = vector.shape_cast %56 : vector<4x8x32xf32> to vector<1x4x8x32xf32>
    %cst_36 = arith.constant dense<0.000000e+00> : vector<1x8x32xf32>
    %58 = vector.multi_reduction <add>, %57, %cst_36 [1] : vector<1x4x8x32xf32> to vector<1x8x32xf32>
    %59 = vector.shape_cast %58 : vector<1x8x32xf32> to vector<8x32xf32>
    %c0_37 = arith.constant 0 : index
    %c0_38 = arith.constant 0 : index
    %60 = vector.load %arg9[%c0_37, %c0_38] : memref<1x32xf32, #tpu.memory_space<vmem>>, vector<1x32xf32>
    %61 = vector.broadcast %60 : vector<1x32xf32> to vector<8x32xf32>
    %62 = arith.addf %59, %61 : vector<8x32xf32>
    %63 = arith.addf %1, %62 : vector<8x32xf32>
    %c0_39 = arith.constant 0 : index
    %c0_40 = arith.constant 0 : index
    %64 = vector.load %arg10[%c0_39, %c0_40] : memref<1x32xf32, #tpu.memory_space<vmem>>, vector<1x32xf32>
    %c0_41 = arith.constant 0 : index
    %c0_42 = arith.constant 0 : index
    %65 = vector.load %arg11[%c0_41, %c0_42] : memref<1x32xf32, #tpu.memory_space<vmem>>, vector<1x32xf32>
    %cst_43 = arith.constant dense<0.000000e+00> : vector<8xf32>
    %66 = vector.multi_reduction <add>, %63, %cst_43 [1] : vector<8x32xf32> to vector<8xf32>
    %67 = vector.shape_cast %66 : vector<8xf32> to vector<8x1xf32>
    %cst_44 = arith.constant 3.200000e+01 : f32
    %68 = vector.broadcast %cst_44 : f32 to vector<8x1xf32>
    %69 = arith.divf %67, %68 : vector<8x1xf32>
    %70 = vector.broadcast %69 : vector<8x1xf32> to vector<8x32xf32>
    %71 = arith.subf %63, %70 : vector<8x32xf32>
    %72 = arith.mulf %71, %71 : vector<8x32xf32>
    %cst_45 = arith.constant dense<0.000000e+00> : vector<8xf32>
    %73 = vector.multi_reduction <add>, %72, %cst_45 [1] : vector<8x32xf32> to vector<8xf32>
    %74 = vector.shape_cast %73 : vector<8xf32> to vector<8x1xf32>
    %cst_46 = arith.constant 3.200000e+01 : f32
    %75 = vector.broadcast %cst_46 : f32 to vector<8x1xf32>
    %76 = arith.divf %74, %75 : vector<8x1xf32>
    %77 = vector.broadcast %69 : vector<8x1xf32> to vector<8x32xf32>
    %78 = arith.subf %63, %77 : vector<8x32xf32>
    %cst_47 = arith.constant 9.99999974E-6 : f32
    %79 = vector.broadcast %cst_47 : f32 to vector<8x1xf32>
    %80 = arith.addf %76, %79 : vector<8x1xf32>
    %81 = math.rsqrt %80 : vector<8x1xf32>
    %82 = vector.broadcast %81 : vector<8x1xf32> to vector<8x32xf32>
    %83 = arith.mulf %78, %82 : vector<8x32xf32>
    %84 = vector.broadcast %64 : vector<1x32xf32> to vector<8x32xf32>
    %85 = arith.mulf %83, %84 : vector<8x32xf32>
    %86 = vector.broadcast %65 : vector<1x32xf32> to vector<8x32xf32>
    %87 = arith.addf %85, %86 : vector<8x32xf32>
    %c0_48 = arith.constant 0 : index
    %c0_49 = arith.constant 0 : index
    %88 = vector.load %arg12[%c0_48, %c0_49] : memref<32x64xf32, #tpu.memory_space<vmem>>, vector<32x64xf32>
    %cst_50 = arith.constant dense<0.000000e+00> : vector<8x64xf32>
    %89 = tpu.matmul %87, %88, %cst_50 {dimension_numbers = #tpu.dot_dimension_numbers<[1], [0], [0], [1], [0, 0, 1, 1], [], []>} : vector<8x32xf32>, vector<32x64xf32>, vector<8x64xf32> -> vector<8x64xf32>
    %c0_51 = arith.constant 0 : index
    %c0_52 = arith.constant 0 : index
    %90 = vector.load %arg13[%c0_51, %c0_52] : memref<1x64xf32, #tpu.memory_space<vmem>>, vector<1x64xf32>
    %91 = vector.broadcast %90 : vector<1x64xf32> to vector<8x64xf32>
    %92 = arith.addf %89, %91 : vector<8x64xf32>
    %cst_53 = arith.constant 0.000000e+00 : f32
    %93 = vector.broadcast %cst_53 : f32 to vector<8x64xf32>
    %94 = arith.maximumf %92, %93 : vector<8x64xf32>
    %c0_54 = arith.constant 0 : index
    %c0_55 = arith.constant 0 : index
    %95 = vector.load %arg14[%c0_54, %c0_55] : memref<64x32xf32, #tpu.memory_space<vmem>>, vector<64x32xf32>
    %cst_56 = arith.constant dense<0.000000e+00> : vector<8x32xf32>
    %96 = tpu.matmul %94, %95, %cst_56 {dimension_numbers = #tpu.dot_dimension_numbers<[1], [0], [0], [1], [0, 0, 1, 1], [], []>} : vector<8x64xf32>, vector<64x32xf32>, vector<8x32xf32> -> vector<8x32xf32>
    %c0_57 = arith.constant 0 : index
    %c0_58 = arith.constant 0 : index
    %97 = vector.load %arg15[%c0_57, %c0_58] : memref<1x32xf32, #tpu.memory_space<vmem>>, vector<1x32xf32>
    %98 = vector.broadcast %97 : vector<1x32xf32> to vector<8x32xf32>
    %99 = arith.addf %96, %98 : vector<8x32xf32>
    %100 = arith.addf %87, %99 : vector<8x32xf32>
    %c0_59 = arith.constant 0 : index
    %c0_60 = arith.constant 0 : index
    %101 = vector.load %arg16[%c0_59, %c0_60] : memref<1x32xf32, #tpu.memory_space<vmem>>, vector<1x32xf32>
    %c0_61 = arith.constant 0 : index
    %c0_62 = arith.constant 0 : index
    %102 = vector.load %arg17[%c0_61, %c0_62] : memref<1x32xf32, #tpu.memory_space<vmem>>, vector<1x32xf32>
    %cst_63 = arith.constant dense<0.000000e+00> : vector<8xf32>
    %103 = vector.multi_reduction <add>, %100, %cst_63 [1] : vector<8x32xf32> to vector<8xf32>
    %104 = vector.shape_cast %103 : vector<8xf32> to vector<8x1xf32>
    %cst_64 = arith.constant 3.200000e+01 : f32
    %105 = vector.broadcast %cst_64 : f32 to vector<8x1xf32>
    %106 = arith.divf %104, %105 : vector<8x1xf32>
    %107 = vector.broadcast %106 : vector<8x1xf32> to vector<8x32xf32>
    %108 = arith.subf %100, %107 : vector<8x32xf32>
    %109 = arith.mulf %108, %108 : vector<8x32xf32>
    %cst_65 = arith.constant dense<0.000000e+00> : vector<8xf32>
    %110 = vector.multi_reduction <add>, %109, %cst_65 [1] : vector<8x32xf32> to vector<8xf32>
    %111 = vector.shape_cast %110 : vector<8xf32> to vector<8x1xf32>
    %cst_66 = arith.constant 3.200000e+01 : f32
    %112 = vector.broadcast %cst_66 : f32 to vector<8x1xf32>
    %113 = arith.divf %111, %112 : vector<8x1xf32>
    %114 = vector.broadcast %106 : vector<8x1xf32> to vector<8x32xf32>
    %115 = arith.subf %100, %114 : vector<8x32xf32>
    %cst_67 = arith.constant 9.99999974E-6 : f32
    %116 = vector.broadcast %cst_67 : f32 to vector<8x1xf32>
    %117 = arith.addf %113, %116 : vector<8x1xf32>
    %118 = math.rsqrt %117 : vector<8x1xf32>
    %119 = vector.broadcast %118 : vector<8x1xf32> to vector<8x32xf32>
    %120 = arith.mulf %115, %119 : vector<8x32xf32>
    %121 = vector.broadcast %101 : vector<1x32xf32> to vector<8x32xf32>
    %122 = arith.mulf %120, %121 : vector<8x32xf32>
    %123 = vector.broadcast %102 : vector<1x32xf32> to vector<8x32xf32>
    %124 = arith.addf %122, %123 : vector<8x32xf32>
    %125 = vector.shape_cast %124 : vector<8x32xf32> to vector<1x8x32xf32>
    %c0_68 = arith.constant 0 : index
    %c0_69 = arith.constant 0 : index
    %c0_70 = arith.constant 0 : index
    %126 = vector.load %arg18[%c0_68, %c0_69, %c0_70] : memref<1x8x32xf32, #tpu.memory_space<vmem>>, vector<1x8x32xf32>
    tpu.vector_store %arg18[%c0_68, %c0_69, %c0_70], %125 {strides = array<i32>} : memref<1x8x32xf32, #tpu.memory_space<vmem>>, vector<1x8x32xf32>,
    return
  }
  func.func @transform_0(%arg0: i32) -> (i32, i32, i32) {
    %c0_i32 = arith.constant 0 : i32
    %c0_i32_0 = arith.constant 0 : i32
    %c0_i32_1 = arith.constant 0 : i32
    return %arg0, %c0_i32, %c0_i32_0 : i32, i32, i32
  }
  func.func @transform_1(%arg0: i32) -> (i32, i32, i32) {
    %c0_i32 = arith.constant 0 : i32
    %c0_i32_0 = arith.constant 0 : i32
    %c0_i32_1 = arith.constant 0 : i32
    %c0_i32_2 = arith.constant 0 : i32
    return %c0_i32, %c0_i32_0, %c0_i32_1 : i32, i32, i32
  }
  func.func @transform_2(%arg0: i32) -> (i32, i32, i32) {
    %c0_i32 = arith.constant 0 : i32
    %c0_i32_0 = arith.constant 0 : i32
    %c0_i32_1 = arith.constant 0 : i32
    %c0_i32_2 = arith.constant 0 : i32
    return %c0_i32, %c0_i32_0, %c0_i32_1 : i32, i32, i32
  }
  func.func @transform_3(%arg0: i32) -> (i32, i32, i32) {
    %c0_i32 = arith.constant 0 : i32
    %c0_i32_0 = arith.constant 0 : i32
    %c0_i32_1 = arith.constant 0 : i32
    %c0_i32_2 = arith.constant 0 : i32
    return %c0_i32, %c0_i32_0, %c0_i32_1 : i32, i32, i32
  }
  func.func @transform_4(%arg0: i32) -> (i32, i32, i32) {
    %c0_i32 = arith.constant 0 : i32
    %c0_i32_0 = arith.constant 0 : i32
    %c0_i32_1 = arith.constant 0 : i32
    %c0_i32_2 = arith.constant 0 : i32
    return %c0_i32, %c0_i32_0, %c0_i32_1 : i32, i32, i32
  }
  func.func @transform_5(%arg0: i32) -> (i32, i32, i32) {
    %c0_i32 = arith.constant 0 : i32
    %c0_i32_0 = arith.constant 0 : i32
    %c0_i32_1 = arith.constant 0 : i32
    %c0_i32_2 = arith.constant 0 : i32
    return %c0_i32, %c0_i32_0, %c0_i32_1 : i32, i32, i32
  }
  func.func @transform_6(%arg0: i32) -> (i32, i32, i32) {
    %c0_i32 = arith.constant 0 : i32
    %c0_i32_0 = arith.constant 0 : i32
    %c0_i32_1 = arith.constant 0 : i32
    %c0_i32_2 = arith.constant 0 : i32
    return %c0_i32, %c0_i32_0, %c0_i32_1 : i32, i32, i32
  }
  func.func @transform_7(%arg0: i32) -> (i32, i32, i32) {
    %c0_i32 = arith.constant 0 : i32
    %c0_i32_0 = arith.constant 0 : i32
    %c0_i32_1 = arith.constant 0 : i32
    %c0_i32_2 = arith.constant 0 : i32
    return %c0_i32, %c0_i32_0, %c0_i32_1 : i32, i32, i32
  }
  func.func @transform_8(%arg0: i32) -> (i32, i32) {
    %c0_i32 = arith.constant 0 : i32
    %c0_i32_0 = arith.constant 0 : i32
    %c0_i32_1 = arith.constant 0 : i32
    return %c0_i32, %c0_i32_0 : i32, i32
  }
  func.func @transform_9(%arg0: i32) -> (i32, i32) {
    %c0_i32 = arith.constant 0 : i32
    %c0_i32_0 = arith.constant 0 : i32
    %c0_i32_1 = arith.constant 0 : i32
    return %c0_i32, %c0_i32_0 : i32, i32
  }
  func.func @transform_10(%arg0: i32) -> (i32, i32) {
    %c0_i32 = arith.constant 0 : i32
    %c0_i32_0 = arith.constant 0 : i32
    %c0_i32_1 = arith.constant 0 : i32
    return %c0_i32, %c0_i32_0 : i32, i32
  }
  func.func @transform_11(%arg0: i32) -> (i32, i32) {
    %c0_i32 = arith.constant 0 : i32
    %c0_i32_0 = arith.constant 0 : i32
    %c0_i32_1 = arith.constant 0 : i32
    return %c0_i32, %c0_i32_0 : i32, i32
  }
  func.func @transform_12(%arg0: i32) -> (i32, i32) {
    %c0_i32 = arith.constant 0 : i32
    %c0_i32_0 = arith.constant 0 : i32
    %c0_i32_1 = arith.constant 0 : i32
    return %c0_i32, %c0_i32_0 : i32, i32
  }
  func.func @transform_13(%arg0: i32) -> (i32, i32) {
    %c0_i32 = arith.constant 0 : i32
    %c0_i32_0 = arith.constant 0 : i32
    %c0_i32_1 = arith.constant 0 : i32
    return %c0_i32, %c0_i32_0 : i32, i32
  }
  func.func @transform_14(%arg0: i32) -> (i32, i32) {
    %c0_i32 = arith.constant 0 : i32
    %c0_i32_0 = arith.constant 0 : i32
    %c0_i32_1 = arith.constant 0 : i32
    return %c0_i32, %c0_i32_0 : i32, i32
  }
  func.func @transform_15(%arg0: i32) -> (i32, i32) {
    %c0_i32 = arith.constant 0 : i32
    %c0_i32_0 = arith.constant 0 : i32
    %c0_i32_1 = arith.constant 0 : i32
    return %c0_i32, %c0_i32_0 : i32, i32
  }
  func.func @transform_16(%arg0: i32) -> (i32, i32) {
    %c0_i32 = arith.constant 0 : i32
    %c0_i32_0 = arith.constant 0 : i32
    %c0_i32_1 = arith.constant 0 : i32
    return %c0_i32, %c0_i32_0 : i32, i32
  }
  func.func @transform_17(%arg0: i32) -> (i32, i32, i32) {
    %c0_i32 = arith.constant 0 : i32
    %c0_i32_0 = arith.constant 0 : i32
    %c0_i32_1 = arith.constant 0 : i32
    return %arg0, %c0_i32, %c0_i32_0 : i32, i32, i32
  }
  func.func @transform_18(%arg0: i32) -> (i32, i32, i32, i32) {
    %c0_i32 = arith.constant 0 : i32
    %c0_i32_0 = arith.constant 0 : i32
    %c0_i32_1 = arith.constant 0 : i32
    %c0_i32_2 = arith.constant 0 : i32
    return %arg0, %c0_i32, %c0_i32_0, %c0_i32_1 : i32, i32, i32, i32
  }
}

</mosaic_0001>

<llo_original>
// kernel: tpu_custom_call.1
$region0: #{tpu_custom_call.1}
  #allocation0 [shape = 'u32[]', space=smem, size = 0x4, offset = 0x4, fixed_abs, tag = 'smem constant byte address 0x4 - core index']
  #allocation1 [shape = 'u32[72,128]{1,0:T(1,128)}', space=vmem, size = 0x9000, scoped, tag = 'internal scratch']
  %s0 = inlined_call_operand.vmem [shape: f32[2,8,32], index: 0, kind: input, shape index: {}]
  %s1 = inlined_call_operand.vmem [shape: f32[4,32,8], index: 1, kind: input, shape index: {}]
  %s2 = inlined_call_operand.vmem [shape: f32[4,1,8], index: 2, kind: input, shape index: {}]
  %s3 = inlined_call_operand.vmem [shape: f32[4,32,8], index: 3, kind: input, shape index: {}]
  %s4 = inlined_call_operand.vmem [shape: f32[4,1,8], index: 4, kind: input, shape index: {}]
  %s5 = inlined_call_operand.vmem [shape: f32[4,32,8], index: 5, kind: input, shape index: {}]
  %s6 = inlined_call_operand.vmem [shape: f32[4,1,8], index: 6, kind: input, shape index: {}]
  %s7 = inlined_call_operand.vmem [shape: f32[4,8,32], index: 7, kind: input, shape index: {}]
  %s8 = inlined_call_operand.vmem [shape: f32[1,32], index: 8, kind: input, shape index: {}]
  %s9 = inlined_call_operand.vmem [shape: f32[1,32], index: 9, kind: input, shape index: {}]
  %s10 = inlined_call_operand.vmem [shape: f32[1,32], index: 10, kind: input, shape index: {}]
  %s11 = inlined_call_operand.vmem [shape: f32[32,64], index: 11, kind: input, shape index: {}]
  %s12 = inlined_call_operand.vmem [shape: f32[1,64], index: 12, kind: input, shape index: {}]
  %s13 = inlined_call_operand.vmem [shape: f32[64,32], index: 13, kind: input, shape index: {}]
  %s14 = inlined_call_operand.vmem [shape: f32[1,32], index: 14, kind: input, shape index: {}]
  %s15 = inlined_call_operand.vmem [shape: f32[1,32], index: 15, kind: input, shape index: {}]
  %s16 = inlined_call_operand.vmem [shape: f32[1,32], index: 16, kind: input, shape index: {}]
  %s17 = inlined_call_operand.hbm [shape: f32[2,8,32], index: 17, kind: output, shape index: {0}]
  %s18 = inlined_call_operand.hbm [shape: f32[2,4,8,8], index: 18, kind: output, shape index: {1}]
  %19 = xla_tuple %s17, %s18
  %s20 = sld [smem:[#allocation0]]
  $region109: #{tpu_custom_call.1} parent=0
    _
  %s22 = ssub.s32 1, %s20
  %s23 = scalar_select 0, %s22, %s20
  $region1: #{tpu_custom_call.1} parent=0
    #allocation2 [shape = 'u8[8192]{0}', space=vmem, size = 0x2000, scoped, tag = 'output window, operand 0']
    #allocation3 [shape = 's32[2]{0}', space=sflag, size = 0x8, scoped, tag = 'scoped memory for tpu_custom_call.1']
    #allocation4 [shape = 'u8[32768]{0}', space=vmem, size = 0x8000, scoped, tag = 'output window, operand 1']
    #allocation5 [shape = 's32[2]{0}', space=sflag, size = 0x8, scoped, tag = 'scoped memory for tpu_custom_call.1']
    %24 = vsyncpa [#allocation3], 0
    %s25 = scalar_lea.sflag [#allocation3], 1
    %26 = vsyncpa %s25, 0
    %27 = vsyncpa [#allocation5], 0
    %s28 = scalar_lea.sflag [#allocation5], 1
    %29 = vsyncpa %s28, 0
    loop: start=0, step=1, limit=4
    $region2: #{tpu_custom_call.1} parent=1 // loop_pre_header
      _
    $region3: #{tpu_custom_call.1} parent=1 // loop_header
      %s31 = sphi 0, %s35
      %p32 = scmp.ge.s32.totalorder %s31, 4
      %s41 = sphi 0, %s43
      %s44 = sphi 0, %s41
      %s45 = sphi 0, %s44
      %s61 = sphi 0, %s45
      %s65 = sphi 0, %s65
      %s67 = sphi 0, %s65
      %s68 = sphi 0, %s67
      %s82 = sphi 0, %s68
      %s86 = sphi 0, %s86
      %s88 = sphi 0, %s86
      %s89 = sphi 0, %s88
      %s103 = sphi 0, %s89
      %s107 = sphi 0, %s107
      %s109 = sphi 0, %s107
      %s110 = sphi 0, %s109
      %s124 = sphi 0, %s110
      %s128 = sphi 0, %s128
      %s130 = sphi 0, %s128
      %s131 = sphi 0, %s130
      %s145 = sphi 0, %s131
      %s149 = sphi 0, %s149
      %s151 = sphi 0, %s149
      %s152 = sphi 0, %s151
      %s166 = sphi 0, %s152
      %s170 = sphi 0, %s170
      %s172 = sphi 0, %s170
      %s173 = sphi 0, %s172
      %s187 = sphi 0, %s173
      %s191 = sphi 0, %s191
      %s193 = sphi 0, %s191
      %s194 = sphi 0, %s193
      %s208 = sphi 0, %s194
      %s212 = sphi 0, %s212
      %s214 = sphi 0, %s212
      %s215 = sphi 0, %s214
      %s229 = sphi 0, %s215
      %s233 = sphi 0, %s233
      %s235 = sphi 0, %s233
      %s236 = sphi 0, %s235
      %s250 = sphi 0, %s236
      %s254 = sphi 0, %s254
      %s256 = sphi 0, %s254
      %s257 = sphi 0, %s256
      %s271 = sphi 0, %s257
      %s275 = sphi 0, %s275
      %s277 = sphi 0, %s275
      %s278 = sphi 0, %s277
      %s292 = sphi 0, %s278
      %s296 = sphi 0, %s296
      %s298 = sphi 0, %s296
      %s299 = sphi 0, %s298
      %s313 = sphi 0, %s299
      %s317 = sphi 0, %s317
      %s319 = sphi 0, %s317
      %s320 = sphi 0, %s319
      %s334 = sphi 0, %s320
      %s338 = sphi 0, %s338
      %s340 = sphi 0, %s338
      %s341 = sphi 0, %s340
      %s355 = sphi 0, %s341
      %s359 = sphi 0, %s359
      %s361 = sphi 0, %s359
      %s362 = sphi 0, %s361
      %s376 = sphi 0, %s362
      %s380 = sphi 0, %s380
      %s382 = sphi 0, %s380
      %s383 = sphi 0, %s382
      %s397 = sphi 0, %s383
      %s403 = sphi 0, %s405
      %s406 = sphi 0, %s403
      %s407 = sphi 0, %s406
      %s423 = sphi 0, %s407
      %s429 = sphi 0, %s431
      %s432 = sphi 0, %s429
      %s433 = sphi 0, %s432
      %s449 = sphi 0, %s433
    $region4: #{tpu_custom_call.1} parent=1 // loop_header_branch
      %34 = sbr.rel (%p32) target = $region8
    $region5: #{tpu_custom_call.1} parent=1 // loop_body
      %s36 = ssub.s32 %s31, 1
      %s37 = ssub.s32 %s31, 2
      %s38 = sadd.s32 %s31, 1
      %s39 = ssub.s32 %s31, %s38
      %p40 = scmp.eq.s32.totalorder %s39, 0
      %s42 = sadd.s32 %s41, 1
      %s43 = scalar_select %p40, %s41, %s42
      %p46 = pneg %p40
      %p47 = scmp.eq.s32.totalorder %s31, 1
      %p48 = por %p46, %p47
      %p49 = scmp.ne.s32.totalorder %s41, %s44
      %p50 = scmp.eq.s32.totalorder %s31, 0
      %p51 = por %p49, %p50
      %p52 = scmp.ne.s32.totalorder %s41, %s44
      %p53 = scmp.eq.s32.totalorder %s36, 1
      %p54 = por %p52, %p53
      %p55 = scmp.ne.s32.totalorder %s44, %s45
      %p56 = scmp.eq.s32.totalorder %s36, 0
      %p57 = por %p55, %p56
      %p58 = scmp.ne.s32.totalorder %s44, %s45
      %p59 = scmp.eq.s32.totalorder %s37, 1
      %p60 = por %p58, %p59
      %p62 = scmp.ne.s32.totalorder %s45, %s61
      %p63 = scmp.eq.s32.totalorder %s37, 0
      %p64 = por %p62, %p63
      %s66 = sadd.s32 %s65, 1
      %p69 = scmp.eq.s32.totalorder %s31, 1
      %p70 = scmp.ne.s32.totalorder %s65, %s67
      %p71 = scmp.eq.s32.totalorder %s31, 0
      %p72 = por %p70, %p71
      %p73 = scmp.ne.s32.totalorder %s65, %s67
      %p74 = scmp.eq.s32.totalorder %s36, 1
      %p75 = por %p73, %p74
      %p76 = scmp.ne.s32.totalorder %s67, %s68
      %p77 = scmp.eq.s32.totalorder %s36, 0
      %p78 = por %p76, %p77
      %p79 = scmp.ne.s32.totalorder %s67, %s68
      %p80 = scmp.eq.s32.totalorder %s37, 1
      %p81 = por %p79, %p80
      %p83 = scmp.ne.s32.totalorder %s68, %s82
      %p84 = scmp.eq.s32.totalorder %s37, 0
      %p85 = por %p83, %p84
      %s87 = sadd.s32 %s86, 1
      %p90 = scmp.eq.s32.totalorder %s31, 1
      %p91 = scmp.ne.s32.totalorder %s86, %s88
      %p92 = scmp.eq.s32.totalorder %s31, 0
      %p93 = por %p91, %p92
      %p94 = scmp.ne.s32.totalorder %s86, %s88
      %p95 = scmp.eq.s32.totalorder %s36, 1
      %p96 = por %p94, %p95
      %p97 = scmp.ne.s32.totalorder %s88, %s89
      %p98 = scmp.eq.s32.totalorder %s36, 0
      %p99 = por %p97, %p98
      %p100 = scmp.ne.s32.totalorder %s88, %s89
      %p101 = scmp.eq.s32.totalorder %s37, 1
      %p102 = por %p100, %p101
      %p104 = scmp.ne.s32.totalorder %s89, %s103
      %p105 = scmp.eq.s32.totalorder %s37, 0
      %p106 = por %p104, %p105
      %s108 = sadd.s32 %s107, 1
      %p111 = scmp.eq.s32.totalorder %s31, 1
      %p112 = scmp.ne.s32.totalorder %s107, %s109
      %p113 = scmp.eq.s32.totalorder %s31, 0
      %p114 = por %p112, %p113
      %p115 = scmp.ne.s32.totalorder %s107, %s109
      %p116 = scmp.eq.s32.totalorder %s36, 1
      %p117 = por %p115, %p116
      %p118 = scmp.ne.s32.totalorder %s109, %s110
      %p119 = scmp.eq.s32.totalorder %s36, 0
      %p120 = por %p118, %p119
      %p121 = scmp.ne.s32.totalorder %s109, %s110
      %p122 = scmp.eq.s32.totalorder %s37, 1
      %p123 = por %p121, %p122
      %p125 = scmp.ne.s32.totalorder %s110, %s124
      %p126 = scmp.eq.s32.totalorder %s37, 0
      %p127 = por %p125, %p126
      %s129 = sadd.s32 %s128, 1
      %p132 = scmp.eq.s32.totalorder %s31, 1
      %p133 = scmp.ne.s32.totalorder %s128, %s130
      %p134 = scmp.eq.s32.totalorder %s31, 0
      %p135 = por %p133, %p134
      %p136 = scmp.ne.s32.totalorder %s128, %s130
      %p137 = scmp.eq.s32.totalorder %s36, 1
      %p138 = por %p136, %p137
      %p139 = scmp.ne.s32.totalorder %s130, %s131
      %p140 = scmp.eq.s32.totalorder %s36, 0
      %p141 = por %p139, %p140
      %p142 = scmp.ne.s32.totalorder %s130, %s131
      %p143 = scmp.eq.s32.totalorder %s37, 1
      %p144 = por %p142, %p143
      %p146 = scmp.ne.s32.totalorder %s131, %s145
      %p147 = scmp.eq.s32.totalorder %s37, 0
      %p148 = por %p146, %p147
      %s150 = sadd.s32 %s149, 1
      %p153 = scmp.eq.s32.totalorder %s31, 1
      %p154 = scmp.ne.s32.totalorder %s149, %s151
      %p155 = scmp.eq.s32.totalorder %s31, 0
      %p156 = por %p154, %p155
      %p157 = scmp.ne.s32.totalorder %s149, %s151
      %p158 = scmp.eq.s32.totalorder %s36, 1
      %p159 = por %p157, %p158
      %p160 = scmp.ne.s32.totalorder %s151, %s152
      %p161 = scmp.eq.s32.totalorder %s36, 0
      %p162 = por %p160, %p161
      %p163 = scmp.ne.s32.totalorder %s151, %s152
      %p164 = scmp.eq.s32.totalorder %s37, 1
      %p165 = por %p163, %p164
      %p167 = scmp.ne.s32.totalorder %s152, %s166
      %p168 = scmp.eq.s32.totalorder %s37, 0
      %p169 = por %p167, %p168
      %s171 = sadd.s32 %s170, 1
      %p174 = scmp.eq.s32.totalorder %s31, 1
      %p175 = scmp.ne.s32.totalorder %s170, %s172
      %p176 = scmp.eq.s32.totalorder %s31, 0
      %p177 = por %p175, %p176
      %p178 = scmp.ne.s32.totalorder %s170, %s172
      %p179 = scmp.eq.s32.totalorder %s36, 1
      %p180 = por %p178, %p179
      %p181 = scmp.ne.s32.totalorder %s172, %s173
      %p182 = scmp.eq.s32.totalorder %s36, 0
      %p183 = por %p181, %p182
      %p184 = scmp.ne.s32.totalorder %s172, %s173
      %p185 = scmp.eq.s32.totalorder %s37, 1
      %p186 = por %p184, %p185
      %p188 = scmp.ne.s32.totalorder %s173, %s187
      %p189 = scmp.eq.s32.totalorder %s37, 0
      %p190 = por %p188, %p189
      %s192 = sadd.s32 %s191, 1
      %p195 = scmp.eq.s32.totalorder %s31, 1
      %p196 = scmp.ne.s32.totalorder %s191, %s193
      %p197 = scmp.eq.s32.totalorder %s31, 0
      %p198 = por %p196, %p197
      %p199 = scmp.ne.s32.totalorder %s191, %s193
      %p200 = scmp.eq.s32.totalorder %s36, 1
      %p201 = por %p199, %p200
      %p202 = scmp.ne.s32.totalorder %s193, %s194
      %p203 = scmp.eq.s32.totalorder %s36, 0
      %p204 = por %p202, %p203
      %p205 = scmp.ne.s32.totalorder %s193, %s194
      %p206 = scmp.eq.s32.totalorder %s37, 1
      %p207 = por %p205, %p206
      %p209 = scmp.ne.s32.totalorder %s194, %s208
      %p210 = scmp.eq.s32.totalorder %s37, 0
      %p211 = por %p209, %p210
      %s213 = sadd.s32 %s212, 1
      %p216 = scmp.eq.s32.totalorder %s31, 1
      %p217 = scmp.ne.s32.totalorder %s212, %s214
      %p218 = scmp.eq.s32.totalorder %s31, 0
      %p219 = por %p217, %p218
      %p220 = scmp.ne.s32.totalorder %s212, %s214
      %p221 = scmp.eq.s32.totalorder %s36, 1
      %p222 = por %p220, %p221
      %p223 = scmp.ne.s32.totalorder %s214, %s215
      %p224 = scmp.eq.s32.totalorder %s36, 0
      %p225 = por %p223, %p224
      %p226 = scmp.ne.s32.totalorder %s214, %s215
      %p227 = scmp.eq.s32.totalorder %s37, 1
      %p228 = por %p226, %p227
      %p230 = scmp.ne.s32.totalorder %s215, %s229
      %p231 = scmp.eq.s32.totalorder %s37, 0
      %p232 = por %p230, %p231
      %s234 = sadd.s32 %s233, 1
      %p237 = scmp.eq.s32.totalorder %s31, 1
      %p238 = scmp.ne.s32.totalorder %s233, %s235
      %p239 = scmp.eq.s32.totalorder %s31, 0
      %p240 = por %p238, %p239
      %p241 = scmp.ne.s32.totalorder %s233, %s235
      %p242 = scmp.eq.s32.totalorder %s36, 1
      %p243 = por %p241, %p242
      %p244 = scmp.ne.s32.totalorder %s235, %s236
      %p245 = scmp.eq.s32.totalorder %s36, 0
      %p246 = por %p244, %p245
      %p247 = scmp.ne.s32.totalorder %s235, %s236
      %p248 = scmp.eq.s32.totalorder %s37, 1
      %p249 = por %p247, %p248
      %p251 = scmp.ne.s32.totalorder %s236, %s250
      %p252 = scmp.eq.s32.totalorder %s37, 0
      %p253 = por %p251, %p252
      %s255 = sadd.s32 %s254, 1
      %p258 = scmp.eq.s32.totalorder %s31, 1
      %p259 = scmp.ne.s32.totalorder %s254, %s256
      %p260 = scmp.eq.s32.totalorder %s31, 0
      %p261 = por %p259, %p260
      %p262 = scmp.ne.s32.totalorder %s254, %s256
      %p263 = scmp.eq.s32.totalorder %s36, 1
      %p264 = por %p262, %p263
      %p265 = scmp.ne.s32.totalorder %s256, %s257
      %p266 = scmp.eq.s32.totalorder %s36, 0
      %p267 = por %p265, %p266
      %p268 = scmp.ne.s32.totalorder %s256, %s257
      %p269 = scmp.eq.s32.totalorder %s37, 1
      %p270 = por %p268, %p269
      %p272 = scmp.ne.s32.totalorder %s257, %s271
      %p273 = scmp.eq.s32.totalorder %s37, 0
      %p274 = por %p272, %p273
      %s276 = sadd.s32 %s275, 1
      %p279 = scmp.eq.s32.totalorder %s31, 1
      %p280 = scmp.ne.s32.totalorder %s275, %s277
      %p281 = scmp.eq.s32.totalorder %s31, 0
      %p282 = por %p280, %p281
      %p283 = scmp.ne.s32.totalorder %s275, %s277
      %p284 = scmp.eq.s32.totalorder %s36, 1
      %p285 = por %p283, %p284
      %p286 = scmp.ne.s32.totalorder %s277, %s278
      %p287 = scmp.eq.s32.totalorder %s36, 0
      %p288 = por %p286, %p287
      %p289 = scmp.ne.s32.totalorder %s277, %s278
      %p290 = scmp.eq.s32.totalorder %s37, 1
      %p291 = por %p289, %p290
      %p293 = scmp.ne.s32.totalorder %s278, %s292
      %p294 = scmp.eq.s32.totalorder %s37, 0
      %p295 = por %p293, %p294
      %s297 = sadd.s32 %s296, 1
      %p300 = scmp.eq.s32.totalorder %s31, 1
      %p301 = scmp.ne.s32.totalorder %s296, %s298
      %p302 = scmp.eq.s32.totalorder %s31, 0
      %p303 = por %p301, %p302
      %p304 = scmp.ne.s32.totalorder %s296, %s298
      %p305 = scmp.eq.s32.totalorder %s36, 1
      %p306 = por %p304, %p305
      %p307 = scmp.ne.s32.totalorder %s298, %s299
      %p308 = scmp.eq.s32.totalorder %s36, 0
      %p309 = por %p307, %p308
      %p310 = scmp.ne.s32.totalorder %s298, %s299
      %p311 = scmp.eq.s32.totalorder %s37, 1
      %p312 = por %p310, %p311
      %p314 = scmp.ne.s32.totalorder %s299, %s313
      %p315 = scmp.eq.s32.totalorder %s37, 0
      %p316 = por %p314, %p315
      %s318 = sadd.s32 %s317, 1
      %p321 = scmp.eq.s32.totalorder %s31, 1
      %p322 = scmp.ne.s32.totalorder %s317, %s319
      %p323 = scmp.eq.s32.totalorder %s31, 0
      %p324 = por %p322, %p323
      %p325 = scmp.ne.s32.totalorder %s317, %s319
      %p326 = scmp.eq.s32.totalorder %s36, 1
      %p327 = por %p325, %p326
      %p328 = scmp.ne.s32.totalorder %s319, %s320
      %p329 = scmp.eq.s32.totalorder %s36, 0
      %p330 = por %p328, %p329
      %p331 = scmp.ne.s32.totalorder %s319, %s320
      %p332 = scmp.eq.s32.totalorder %s37, 1
      %p333 = por %p331, %p332
      %p335 = scmp.ne.s32.totalorder %s320, %s334
      %p336 = scmp.eq.s32.totalorder %s37, 0
      %p337 = por %p335, %p336
      %s339 = sadd.s32 %s338, 1
      %p342 = scmp.eq.s32.totalorder %s31, 1
      %p343 = scmp.ne.s32.totalorder %s338, %s340
      %p344 = scmp.eq.s32.totalorder %s31, 0
      %p345 = por %p343, %p344
      %p346 = scmp.ne.s32.totalorder %s338, %s340
      %p347 = scmp.eq.s32.totalorder %s36, 1
      %p348 = por %p346, %p347
      %p349 = scmp.ne.s32.totalorder %s340, %s341
      %p350 = scmp.eq.s32.totalorder %s36, 0
      %p351 = por %p349, %p350
      %p352 = scmp.ne.s32.totalorder %s340, %s341
      %p353 = scmp.eq.s32.totalorder %s37, 1
      %p354 = por %p352, %p353
      %p356 = scmp.ne.s32.totalorder %s341, %s355
      %p357 = scmp.eq.s32.totalorder %s37, 0
      %p358 = por %p356, %p357
      %s360 = sadd.s32 %s359, 1
      %p363 = scmp.eq.s32.totalorder %s31, 1
      %p364 = scmp.ne.s32.totalorder %s359, %s361
      %p365 = scmp.eq.s32.totalorder %s31, 0
      %p366 = por %p364, %p365
      %p367 = scmp.ne.s32.totalorder %s359, %s361
      %p368 = scmp.eq.s32.totalorder %s36, 1
      %p369 = por %p367, %p368
      %p370 = scmp.ne.s32.totalorder %s361, %s362
      %p371 = scmp.eq.s32.totalorder %s36, 0
      %p372 = por %p370, %p371
      %p373 = scmp.ne.s32.totalorder %s361, %s362
      %p374 = scmp.eq.s32.totalorder %s37, 1
      %p375 = por %p373, %p374
      %p377 = scmp.ne.s32.totalorder %s362, %s376
      %p378 = scmp.eq.s32.totalorder %s37, 0
      %p379 = por %p377, %p378
      %s381 = sadd.s32 %s380, 1
      %p384 = scmp.eq.s32.totalorder %s31, 1
      %p385 = scmp.ne.s32.totalorder %s380, %s382
      %p386 = scmp.eq.s32.totalorder %s31, 0
      %p387 = por %p385, %p386
      %p388 = scmp.ne.s32.totalorder %s380, %s382
      %p389 = scmp.eq.s32.totalorder %s36, 1
      %p390 = por %p388, %p389
      %p391 = scmp.ne.s32.totalorder %s382, %s383
      %p392 = scmp.eq.s32.totalorder %s36, 0
      %p393 = por %p391, %p392
      %p394 = scmp.ne.s32.totalorder %s382, %s383
      %p395 = scmp.eq.s32.totalorder %s37, 1
      %p396 = por %p394, %p395
      %p398 = scmp.ne.s32.totalorder %s383, %s397
      %p399 = scmp.eq.s32.totalorder %s37, 0
      %p400 = por %p398, %p399
      %s401 = ssub.s32 %s31, %s38
      %p402 = scmp.eq.s32.totalorder %s401, 0
      %s404 = sadd.s32 %s403, 1
      %s405 = scalar_select %p402, %s403, %s404
      %p408 = pneg %p402
      %p409 = scmp.eq.s32.totalorder %s31, 1
      %p410 = por %p408, %p409
      %p411 = scmp.ne.s32.totalorder %s403, %s406
      %p412 = scmp.eq.s32.totalorder %s31, 0
      %p413 = por %p411, %p412
      %p414 = scmp.ne.s32.totalorder %s403, %s406
      %p415 = scmp.eq.s32.totalorder %s36, 1
      %p416 = por %p414, %p415
      %p417 = scmp.ne.s32.totalorder %s406, %s407
      %p418 = scmp.eq.s32.totalorder %s36, 0
      %p419 = por %p417, %p418
      %p420 = scmp.ne.s32.totalorder %s406, %s407
      %p421 = scmp.eq.s32.totalorder %s37, 1
      %p422 = por %p420, %p421
      %p424 = scmp.ne.s32.totalorder %s407, %s423
      %p425 = scmp.eq.s32.totalorder %s37, 0
      %p426 = por %p424, %p425
      %s427 = ssub.s32 %s31, %s38
      %p428 = scmp.eq.s32.totalorder %s427, 0
      %s430 = sadd.s32 %s429, 1
      %s431 = scalar_select %p428, %s429, %s430
      %p434 = pneg %p428
      %p435 = scmp.eq.s32.totalorder %s31, 1
      %p436 = por %p434, %p435
      %p437 = scmp.ne.s32.totalorder %s429, %s432
      %p438 = scmp.eq.s32.totalorder %s31, 0
      %p439 = por %p437, %p438
      %p440 = scmp.ne.s32.totalorder %s429, %s432
      %p441 = scmp.eq.s32.totalorder %s36, 1
      %p442 = por %p440, %p441
      %p443 = scmp.ne.s32.totalorder %s432, %s433
      %p444 = scmp.eq.s32.totalorder %s36, 0
      %p445 = por %p443, %p444
      %p446 = scmp.ne.s32.totalorder %s432, %s433
      %p447 = scmp.eq.s32.totalorder %s37, 1
      %p448 = por %p446, %p447
      %p450 = scmp.ne.s32.totalorder %s433, %s449
      %p451 = scmp.eq.s32.totalorder %s37, 0
      %p452 = por %p450, %p451
      %p453 = scmp.le.s32.totalorder 1, %s31
      %p454 = scmp.lt.s32.totalorder %s31, 3
      %p455 = pnand %p453, %p454
      %p456 = pneg %p455
      // Predicated region
      $region9: #{tpu_custom_call.1} parent=5 // pred_check
        _
      $region10: #{tpu_custom_call.1} parent=5 // pred_check_branch
        %458 = sbr.rel (%p455) target = $region12
      $region11: #{tpu_custom_call.1} parent=5 // pred_region
        %s459 = ssub.s32 %s31, 1
        // Predicated region
        $region13: #{tpu_custom_call.1} parent=11 // pred_check
          %p460 = pneg %p78
        $region14: #{tpu_custom_call.1} parent=11 // pred_check_branch
          %462 = sbr.rel (%p460) target = $region16
        $region15: #{tpu_custom_call.1} parent=11 // pred_region
          _
        $region16: #{tpu_custom_call.1} parent=11 // pred_fallthru
          _
        // Predicated region
        $region17: #{tpu_custom_call.1} parent=11 // pred_check
          %p463 = pneg %p99
        $region18: #{tpu_custom_call.1} parent=11 // pred_check_branch
          %465 = sbr.rel (%p463) target = $region20
        $region19: #{tpu_custom_call.1} parent=11 // pred_region
          _
        $region20: #{tpu_custom_call.1} parent=11 // pred_fallthru
          _
        // Predicated region
        $region21: #{tpu_custom_call.1} parent=11 // pred_check
          %p466 = pneg %p120
        $region22: #{tpu_custom_call.1} parent=11 // pred_check_branch
          %468 = sbr.rel (%p466) target = $region24
        $region23: #{tpu_custom_call.1} parent=11 // pred_region
          _
        $region24: #{tpu_custom_call.1} parent=11 // pred_fallthru
          _
        // Predicated region
        $region25: #{tpu_custom_call.1} parent=11 // pred_check
          %p469 = pneg %p141
        $region26: #{tpu_custom_call.1} parent=11 // pred_check_branch
          %471 = sbr.rel (%p469) target = $region28
        $region27: #{tpu_custom_call.1} parent=11 // pred_region
          _
        $region28: #{tpu_custom_call.1} parent=11 // pred_fallthru
          _
        // Predicated region
        $region29: #{tpu_custom_call.1} parent=11 // pred_check
          %p472 = pneg %p162
        $region30: #{tpu_custom_call.1} parent=11 // pred_check_branch
          %474 = sbr.rel (%p472) target = $region32
        $region31: #{tpu_custom_call.1} parent=11 // pred_region
          _
        $region32: #{tpu_custom_call.1} parent=11 // pred_fallthru
          _
        // Predicated region
        $region33: #{tpu_custom_call.1} parent=11 // pred_check
          %p475 = pneg %p183
        $region34: #{tpu_custom_call.1} parent=11 // pred_check_branch
          %477 = sbr.rel (%p475) target = $region36
        $region35: #{tpu_custom_call.1} parent=11 // pred_region
          _
        $region36: #{tpu_custom_call.1} parent=11 // pred_fallthru
          _
        // Predicated region
        $region37: #{tpu_custom_call.1} parent=11 // pred_check
          %p478 = pneg %p204
        $region38: #{tpu_custom_call.1} parent=11 // pred_check_branch
          %480 = sbr.rel (%p478) target = $region40
        $region39: #{tpu_custom_call.1} parent=11 // pred_region
          _
        $region40: #{tpu_custom_call.1} parent=11 // pred_fallthru
          _
        // Predicated region
        $region41: #{tpu_custom_call.1} parent=11 // pred_check
          %p481 = pneg %p225
        $region42: #{tpu_custom_call.1} parent=11 // pred_check_branch
          %483 = sbr.rel (%p481) target = $region44
        $region43: #{tpu_custom_call.1} parent=11 // pred_region
          _
        $region44: #{tpu_custom_call.1} parent=11 // pred_fallthru
          _
        // Predicated region
        $region45: #{tpu_custom_call.1} parent=11 // pred_check
          %p484 = pneg %p246
        $region46: #{tpu_custom_call.1} parent=11 // pred_check_branch
          %486 = sbr.rel (%p484) target = $region48
        $region47: #{tpu_custom_call.1} parent=11 // pred_region
          _
        $region48: #{tpu_custom_call.1} parent=11 // pred_fallthru
          _
        // Predicated region
        $region49: #{tpu_custom_call.1} parent=11 // pred_check
          %p487 = pneg %p267
        $region50: #{tpu_custom_call.1} parent=11 // pred_check_branch
          %489 = sbr.rel (%p487) target = $region52
        $region51: #{tpu_custom_call.1} parent=11 // pred_region
          _
        $region52: #{tpu_custom_call.1} parent=11 // pred_fallthru
          _
        // Predicated region
        $region53: #{tpu_custom_call.1} parent=11 // pred_check
          %p490 = pneg %p288
        $region54: #{tpu_custom_call.1} parent=11 // pred_check_branch
          %492 = sbr.rel (%p490) target = $region56
        $region55: #{tpu_custom_call.1} parent=11 // pred_region
          _
        $region56: #{tpu_custom_call.1} parent=11 // pred_fallthru
          _
        // Predicated region
        $region57: #{tpu_custom_call.1} parent=11 // pred_check
          %p493 = pneg %p309
        $region58: #{tpu_custom_call.1} parent=11 // pred_check_branch
          %495 = sbr.rel (%p493) target = $region60
        $region59: #{tpu_custom_call.1} parent=11 // pred_region
          _
        $region60: #{tpu_custom_call.1} parent=11 // pred_fallthru
          _
        // Predicated region
        $region61: #{tpu_custom_call.1} parent=11 // pred_check
          %p496 = pneg %p330
        $region62: #{tpu_custom_call.1} parent=11 // pred_check_branch
          %498 = sbr.rel (%p496) target = $region64
        $region63: #{tpu_custom_call.1} parent=11 // pred_region
          _
        $region64: #{tpu_custom_call.1} parent=11 // pred_fallthru
          _
        // Predicated region
        $region65: #{tpu_custom_call.1} parent=11 // pred_check
          %p499 = pneg %p351
        $region66: #{tpu_custom_call.1} parent=11 // pred_check_branch
          %501 = sbr.rel (%p499) target = $region68
        $region67: #{tpu_custom_call.1} parent=11 // pred_region
          _
        $region68: #{tpu_custom_call.1} parent=11 // pred_fallthru
          _
        // Predicated region
        $region69: #{tpu_custom_call.1} parent=11 // pred_check
          %p502 = pneg %p372
        $region70: #{tpu_custom_call.1} parent=11 // pred_check_branch
          %504 = sbr.rel (%p502) target = $region72
        $region71: #{tpu_custom_call.1} parent=11 // pred_region
          _
        $region72: #{tpu_custom_call.1} parent=11 // pred_fallthru
          _
        // Predicated region
        $region73: #{tpu_custom_call.1} parent=11 // pred_check
          %p505 = pneg %p393
        $region74: #{tpu_custom_call.1} parent=11 // pred_check_branch
          %507 = sbr.rel (%p505) target = $region76
        $region75: #{tpu_custom_call.1} parent=11 // pred_region
          _
        $region76: #{tpu_custom_call.1} parent=11 // pred_fallthru
          _
      $region12: #{tpu_custom_call.1} parent=5 // pred_fallthru
        _
      %p508 = scmp.lt.s32.totalorder %s31, 2
      // Predicated region
      $region77: #{tpu_custom_call.1} parent=5 // pred_check
        %p509 = pneg %p508
      $region78: #{tpu_custom_call.1} parent=5 // pred_check_branch
        %511 = sbr.rel (%p509) target = $region80
      $region79: #{tpu_custom_call.1} parent=5 // pred_region
        // Predicated region
        $region81: #{tpu_custom_call.1} parent=79 // pred_check
          %p512 = pneg %p51
        $region82: #{tpu_custom_call.1} parent=79 // pred_check_branch
          %514 = sbr.rel (%p512) target = $region84
        $region83: #{tpu_custom_call.1} parent=79 // pred_region
          %p515 = scmp.lt.s32.totalorder %s31, 1
          %s516 = scalar_select %p515, %s31, 1
          %s517 = smul.addr %s516, 8
          %s518 = scalar_lea.vmem %s0, %s517
        $region84: #{tpu_custom_call.1} parent=79 // pred_fallthru
          _
      $region80: #{tpu_custom_call.1} parent=5 // pred_fallthru
        _
      %p519 = scmp.le.s32.totalorder 1, %s31
      %p520 = scmp.lt.s32.totalorder %s31, 3
      %p521 = pnand %p519, %p520
      %p522 = pneg %p521
      // Predicated region
      $region85: #{tpu_custom_call.1} parent=5 // pred_check
        _
      $region86: #{tpu_custom_call.1} parent=5 // pred_check_branch
        %524 = sbr.rel (%p521) target = $region88
      $region87: #{tpu_custom_call.1} parent=5 // pred_region
        %s525 = ssub.s32 %s31, 1
        %p526 = scmp.lt.s32.totalorder %s36, 1
        %s527 = scalar_select %p526, %s36, 1
        %s528 = smul.addr %s527, 8
        %s529 = scalar_lea.vmem %s0, %s528
        %p530 = pneg %p57
        %p531 = pneg %p54
        %p532 = pneg %p78
        %p533 = pneg %p75
        %p534 = pneg %p99
        %p535 = pneg %p96
        %p536 = pneg %p120
        %p537 = pneg %p117
        %p538 = pneg %p141
        %p539 = pneg %p138
        %p540 = pneg %p162
        %p541 = pneg %p159
        %p542 = pneg %p183
        %p543 = pneg %p180
        %p544 = pneg %p204
        %p545 = pneg %p201
        %p546 = pneg %p225
        %p547 = pneg %p222
        %p548 = pneg %p246
        %p549 = pneg %p243
        %p550 = pneg %p267
        %p551 = pneg %p264
        %p552 = pneg %p288
        %p553 = pneg %p285
        %p554 = pneg %p309
        %p555 = pneg %p306
        %p556 = pneg %p330
        %p557 = pneg %p327
        %p558 = pneg %p351
        %p559 = pneg %p348
        %p560 = pneg %p372
        %p561 = pneg %p369
        %p562 = pneg %p393
        %p563 = pneg %p390
        %p564 = pneg %p419
        %p565 = pneg %p416
        %s566 = sand.u32 %s406, 1
        %s567 = scalar_lea.sflag [#allocation3], %s566
        %s568 = sand.u32 %s406, 1
        %s569 = smul.addr %s568, 8
        %s570 = scalar_lea.vmem [#allocation2], %s569
        %p571 = pneg %p445
        %p572 = pneg %p442
        %s573 = sand.u32 %s432, 1
        %s574 = scalar_lea.sflag [#allocation5], %s573
        %s575 = sand.u32 %s432, 1
        %s576 = smul.addr %s575, 32
        %s577 = scalar_lea.vmem [#allocation4], %s576
        %p578 = scmp.lt.s32.totalorder %s36, 1
        %s579 = scalar_select %p578, %s36, 1
        %s580 = smul.addr %s579, 8
        %s581 = scalar_lea.vmem %s0, %s580
        %v582 = vld [vmem:[%s581] sm:$0xff]
        %v583 = vld [vmem:[%s1] sm:$0xff]
        %v584 = vld [vmem:[%s1 + $0x8] sm:$0xff]
        %v585 = vld [vmem:[%s1 + $0x10] sm:$0xff]
        %v586 = vld [vmem:[%s1 + $0x18] sm:$0xff]
        %v587 = vld [vmem:[%s1 + $0x20] sm:$0xff]
        %v588 = vld [vmem:[%s1 + $0x28] sm:$0xff]
        %v589 = vld [vmem:[%s1 + $0x30] sm:$0xff]
        %v590 = vld [vmem:[%s1 + $0x38] sm:$0xff]
        %v591 = vld [vmem:[%s1 + $0x40] sm:$0xff]
        %v592 = vld [vmem:[%s1 + $0x48] sm:$0xff]
        %v593 = vld [vmem:[%s1 + $0x50] sm:$0xff]
        %v594 = vld [vmem:[%s1 + $0x58] sm:$0xff]
        %v595 = vld [vmem:[%s1 + $0x60] sm:$0xff]
        %v596 = vld [vmem:[%s1 + $0x68] sm:$0xff]
        %v597 = vld [vmem:[%s1 + $0x70] sm:$0xff]
        %v598 = vld [vmem:[%s1 + $0x78] sm:$0xff]
        %v599 = vld [vmem:[%s3] sm:$0xff]
        %v600 = vld [vmem:[%s3 + $0x8] sm:$0xff]
        %v601 = vld [vmem:[%s3 + $0x10] sm:$0xff]
        %v602 = vld [vmem:[%s3 + $0x18] sm:$0xff]
        %v603 = vld [vmem:[%s3 + $0x20] sm:$0xff]
        %v604 = vld [vmem:[%s3 + $0x28] sm:$0xff]
        %v605 = vld [vmem:[%s3 + $0x30] sm:$0xff]
        %v606 = vld [vmem:[%s3 + $0x38] sm:$0xff]
        %v607 = vld [vmem:[%s3 + $0x40] sm:$0xff]
        %v608 = vld [vmem:[%s3 + $0x48] sm:$0xff]
        %v609 = vld [vmem:[%s3 + $0x50] sm:$0xff]
        %v610 = vld [vmem:[%s3 + $0x58] sm:$0xff]
        %v611 = vld [vmem:[%s3 + $0x60] sm:$0xff]
        %v612 = vld [vmem:[%s3 + $0x68] sm:$0xff]
        %v613 = vld [vmem:[%s3 + $0x70] sm:$0xff]
        %v614 = vld [vmem:[%s3 + $0x78] sm:$0xff]
        %v615 = vld [vmem:[%s5] sm:$0xff]
        %v616 = vld [vmem:[%s5 + $0x8] sm:$0xff]
        %v617 = vld [vmem:[%s5 + $0x10] sm:$0xff]
        %v618 = vld [vmem:[%s5 + $0x18] sm:$0xff]
        %v619 = vld [vmem:[%s5 + $0x20] sm:$0xff]
        %v620 = vld [vmem:[%s5 + $0x28] sm:$0xff]
        %v621 = vld [vmem:[%s5 + $0x30] sm:$0xff]
        %v622 = vld [vmem:[%s5 + $0x38] sm:$0xff]
        %v623 = vld [vmem:[%s5 + $0x40] sm:$0xff]
        %v624 = vld [vmem:[%s5 + $0x48] sm:$0xff]
        %v625 = vld [vmem:[%s5 + $0x50] sm:$0xff]
        %v626 = vld [vmem:[%s5 + $0x58] sm:$0xff]
        %v627 = vld [vmem:[%s5 + $0x60] sm:$0xff]
        %v628 = vld [vmem:[%s5 + $0x68] sm:$0xff]
        %v629 = vld [vmem:[%s5 + $0x70] sm:$0xff]
        %v630 = vld [vmem:[%s5 + $0x78] sm:$0xff]
        %v631 = vld [vmem:[%s7] sm:$0xff]
        %v632 = vld [vmem:[%s7 + $0x8] sm:$0xff]
        %v633 = vld [vmem:[%s7 + $0x10] sm:$0xff]
        %v634 = vld [vmem:[%s7 + $0x18] sm:$0xff]
        %v635 = vld [vmem:[%s2] sm:$0x1]
        %v636 = vld [vmem:[%s2 + $0x1] sm:$0x1]
        %v637 = vld [vmem:[%s2 + $0x2] sm:$0x1]
        %v638 = vld [vmem:[%s2 + $0x3] sm:$0x1]
        %v639 = vld [vmem:[%s4] sm:$0x1]
        %v640 = vld [vmem:[%s4 + $0x1] sm:$0x1]
        %v641 = vld [vmem:[%s4 + $0x2] sm:$0x1]
        %v642 = vld [vmem:[%s4 + $0x3] sm:$0x1]
        %v643 = vld [vmem:[%s6] sm:$0x1]
        %v644 = vld [vmem:[%s6 + $0x1] sm:$0x1]
        %v645 = vld [vmem:[%s6 + $0x2] sm:$0x1]
        %v646 = vld [vmem:[%s6 + $0x3] sm:$0x1]
        %v651 = vperm.slane %v635, 0
        %v652 = vperm.slane %v636, 0
        %v653 = vperm.slane %v637, 0
        %v654 = vperm.slane %v638, 0
        %vm659 = vcmask 261120
        %v661 = vsel %vm659, %v582, 0
        %663 = vmatpush.msra.mxu0 0.0
        %664 = vmatpush.msra.mxu0 0.0
        %665 = vmatpush.msra.mxu0 0.0
        %666 = vmatpush.msra.mxu0 0.0
        %667 = vmatpush.msra.mxu0 0.0
        %668 = vmatpush.msra.mxu0 0.0
        %669 = vmatpush.msra.mxu0 0.0
        %670 = vmatpush.msra.mxu0 0.0
        %671 = vmatpush.msra.mxu0 0.0
        %672 = vmatpush.msra.mxu0 0.0
        %673 = vmatpush.msra.mxu0 0.0
        %674 = vmatpush.msra.mxu0 0.0
        %675 = vmatpush.msra.mxu0 %v586
        %676 = vmatpush.msra.mxu0 %v585
        %677 = vmatpush.msra.mxu0 %v584
        %678 = vmatpush.msra.mxu0 %v583
        %679 = vmatmul.f32.gmra.mxu0 %v661
        %v680 = vpop.f32.mrf.mxu0
        %v681 = vadd.f32 %v651, %v680
        %682 = vdwg.mxu0
        %683 = vmatpush.msra.mxu0 0.0
        %684 = vmatpush.msra.mxu0 0.0
        %685 = vmatpush.msra.mxu0 0.0
        %686 = vmatpush.msra.mxu0 0.0
        %687 = vmatpush.msra.mxu0 0.0
        %688 = vmatpush.msra.mxu0 0.0
        %689 = vmatpush.msra.mxu0 0.0
        %690 = vmatpush.msra.mxu0 0.0
        %691 = vmatpush.msra.mxu0 0.0
        %692 = vmatpush.msra.mxu0 0.0
        %693 = vmatpush.msra.mxu0 0.0
        %694 = vmatpush.msra.mxu0 0.0
        %695 = vmatpush.msra.mxu0 %v590
        %696 = vmatpush.msra.mxu0 %v589
        %697 = vmatpush.msra.mxu0 %v588
        %698 = vmatpush.msra.mxu0 %v587
        %699 = vmatmul.f32.gmra.mxu0 %v661
        %v700 = vpop.f32.mrf.mxu0
        %v701 = vadd.f32 %v652, %v700
        %702 = vdwg.mxu0
        %703 = vmatpush.msra.mxu0 0.0
        %704 = vmatpush.msra.mxu0 0.0
        %705 = vmatpush.msra.mxu0 0.0
        %706 = vmatpush.msra.mxu0 0.0
        %707 = vmatpush.msra.mxu0 0.0
        %708 = vmatpush.msra.mxu0 0.0
        %709 = vmatpush.msra.mxu0 0.0
        %710 = vmatpush.msra.mxu0 0.0
        %711 = vmatpush.msra.mxu0 0.0
        %712 = vmatpush.msra.mxu0 0.0
        %713 = vmatpush.msra.mxu0 0.0
        %714 = vmatpush.msra.mxu0 0.0
        %715 = vmatpush.msra.mxu0 %v594
        %716 = vmatpush.msra.mxu0 %v593
        %717 = vmatpush.msra.mxu0 %v592
        %718 = vmatpush.msra.mxu0 %v591
        %719 = vmatmul.f32.gmra.mxu0 %v661
        %v720 = vpop.f32.mrf.mxu0
        %v721 = vadd.f32 %v653, %v720
        %722 = vdwg.mxu0
        %723 = vmatpush.msra.mxu0 0.0
        %724 = vmatpush.msra.mxu0 0.0
        %725 = vmatpush.msra.mxu0 0.0
        %726 = vmatpush.msra.mxu0 0.0
        %727 = vmatpush.msra.mxu0 0.0
        %728 = vmatpush.msra.mxu0 0.0
        %729 = vmatpush.msra.mxu0 0.0
        %730 = vmatpush.msra.mxu0 0.0
        %731 = vmatpush.msra.mxu0 0.0
        %732 = vmatpush.msra.mxu0 0.0
        %733 = vmatpush.msra.mxu0 0.0
        %734 = vmatpush.msra.mxu0 0.0
        %735 = vmatpush.msra.mxu0 %v598
        %736 = vmatpush.msra.mxu0 %v597
        %737 = vmatpush.msra.mxu0 %v596
        %738 = vmatpush.msra.mxu0 %v595
        %739 = vmatmul.f32.gmra.mxu0 %v661
        %v740 = vpop.f32.mrf.mxu0
        %v741 = vadd.f32 %v654, %v740
        %742 = vdwg.mxu0
        %v743 = vmul.f32 %v681, 0.35355338
        %v744 = vmul.f32 %v701, 0.35355338
        %v745 = vmul.f32 %v721, 0.35355338
        %v746 = vmul.f32 %v741, 0.35355338
        %v751 = vperm.slane %v639, 0
        %v752 = vperm.slane %v640, 0
        %v753 = vperm.slane %v641, 0
        %v754 = vperm.slane %v642, 0
        %759 = vmatpush.msra.mxu0 0.0
        %760 = vmatpush.msra.mxu0 0.0
        %761 = vmatpush.msra.mxu0 0.0
        %762 = vmatpush.msra.mxu0 0.0
        %763 = vmatpush.msra.mxu0 0.0
        %764 = vmatpush.msra.mxu0 0.0
        %765 = vmatpush.msra.mxu0 0.0
        %766 = vmatpush.msra.mxu0 0.0
        %767 = vmatpush.msra.mxu0 0.0
        %768 = vmatpush.msra.mxu0 0.0
        %769 = vmatpush.msra.mxu0 0.0
        %770 = vmatpush.msra.mxu0 0.0
        %771 = vmatpush.msra.mxu0 %v602
        %772 = vmatpush.msra.mxu0 %v601
        %773 = vmatpush.msra.mxu0 %v600
        %774 = vmatpush.msra.mxu0 %v599
        %775 = vmatmul.f32.gmra.mxu0 %v661
        %v776 = vpop.f32.mrf.mxu0
        %v777 = vadd.f32 %v751, %v776
        %778 = vdwg.mxu0
        %779 = vmatpush.msra.mxu0 0.0
        %780 = vmatpush.msra.mxu0 0.0
        %781 = vmatpush.msra.mxu0 0.0
        %782 = vmatpush.msra.mxu0 0.0
        %783 = vmatpush.msra.mxu0 0.0
        %784 = vmatpush.msra.mxu0 0.0
        %785 = vmatpush.msra.mxu0 0.0
        %786 = vmatpush.msra.mxu0 0.0
        %787 = vmatpush.msra.mxu0 0.0
        %788 = vmatpush.msra.mxu0 0.0
        %789 = vmatpush.msra.mxu0 0.0
        %790 = vmatpush.msra.mxu0 0.0
        %791 = vmatpush.msra.mxu0 %v606
        %792 = vmatpush.msra.mxu0 %v605
        %793 = vmatpush.msra.mxu0 %v604
        %794 = vmatpush.msra.mxu0 %v603
        %795 = vmatmul.f32.gmra.mxu0 %v661
        %v796 = vpop.f32.mrf.mxu0
        %v797 = vadd.f32 %v752, %v796
        %798 = vdwg.mxu0
        %799 = vmatpush.msra.mxu0 0.0
        %800 = vmatpush.msra.mxu0 0.0
        %801 = vmatpush.msra.mxu0 0.0
        %802 = vmatpush.msra.mxu0 0.0
        %803 = vmatpush.msra.mxu0 0.0
        %804 = vmatpush.msra.mxu0 0.0
        %805 = vmatpush.msra.mxu0 0.0
        %806 = vmatpush.msra.mxu0 0.0
        %807 = vmatpush.msra.mxu0 0.0
        %808 = vmatpush.msra.mxu0 0.0
        %809 = vmatpush.msra.mxu0 0.0
        %810 = vmatpush.msra.mxu0 0.0
        %811 = vmatpush.msra.mxu0 %v610
        %812 = vmatpush.msra.mxu0 %v609
        %813 = vmatpush.msra.mxu0 %v608
        %814 = vmatpush.msra.mxu0 %v607
        %815 = vmatmul.f32.gmra.mxu0 %v661
        %v816 = vpop.f32.mrf.mxu0
        %v817 = vadd.f32 %v753, %v816
        %818 = vdwg.mxu0
        %819 = vmatpush.msra.mxu0 0.0
        %820 = vmatpush.msra.mxu0 0.0
        %821 = vmatpush.msra.mxu0 0.0
        %822 = vmatpush.msra.mxu0 0.0
        %823 = vmatpush.msra.mxu0 0.0
        %824 = vmatpush.msra.mxu0 0.0
        %825 = vmatpush.msra.mxu0 0.0
        %826 = vmatpush.msra.mxu0 0.0
        %827 = vmatpush.msra.mxu0 0.0
        %828 = vmatpush.msra.mxu0 0.0
        %829 = vmatpush.msra.mxu0 0.0
        %830 = vmatpush.msra.mxu0 0.0
        %831 = vmatpush.msra.mxu0 %v614
        %832 = vmatpush.msra.mxu0 %v613
        %833 = vmatpush.msra.mxu0 %v612
        %834 = vmatpush.msra.mxu0 %v611
        %835 = vmatmul.f32.gmra.mxu0 %v661
        %v836 = vpop.f32.mrf.mxu0
        %v837 = vadd.f32 %v754, %v836
        %838 = vdwg.mxu0
        %v843 = vperm.slane %v643, 0
        %v844 = vperm.slane %v644, 0
        %v845 = vperm.slane %v645, 0
        %v846 = vperm.slane %v646, 0
        %851 = vmatpush.msra.mxu0 0.0
        %852 = vmatpush.msra.mxu0 0.0
        %853 = vmatpush.msra.mxu0 0.0
        %854 = vmatpush.msra.mxu0 0.0
        %855 = vmatpush.msra.mxu0 0.0
        %856 = vmatpush.msra.mxu0 0.0
        %857 = vmatpush.msra.mxu0 0.0
        %858 = vmatpush.msra.mxu0 0.0
        %859 = vmatpush.msra.mxu0 0.0
        %860 = vmatpush.msra.mxu0 0.0
        %861 = vmatpush.msra.mxu0 0.0
        %862 = vmatpush.msra.mxu0 0.0
        %863 = vmatpush.msra.mxu0 %v618
        %864 = vmatpush.msra.mxu0 %v617
        %865 = vmatpush.msra.mxu0 %v616
        %866 = vmatpush.msra.mxu0 %v615
        %867 = vmatmul.f32.gmra.mxu0 %v661
        %v868 = vpop.f32.mrf.mxu0
        %v869 = vadd.f32 %v843, %v868
        %870 = vdwg.mxu0
        %871 = vmatpush.msra.mxu0 0.0
        %872 = vmatpush.msra.mxu0 0.0
        %873 = vmatpush.msra.mxu0 0.0
        %874 = vmatpush.msra.mxu0 0.0
        %875 = vmatpush.msra.mxu0 0.0
        %876 = vmatpush.msra.mxu0 0.0
        %877 = vmatpush.msra.mxu0 0.0
        %878 = vmatpush.msra.mxu0 0.0
        %879 = vmatpush.msra.mxu0 0.0
        %880 = vmatpush.msra.mxu0 0.0
        %881 = vmatpush.msra.mxu0 0.0
        %882 = vmatpush.msra.mxu0 0.0
        %883 = vmatpush.msra.mxu0 %v622
        %884 = vmatpush.msra.mxu0 %v621
        %885 = vmatpush.msra.mxu0 %v620
        %886 = vmatpush.msra.mxu0 %v619
        %887 = vmatmul.f32.gmra.mxu0 %v661
        %v888 = vpop.f32.mrf.mxu0
        %v889 = vadd.f32 %v844, %v888
        %890 = vdwg.mxu0
        %891 = vmatpush.msra.mxu0 0.0
        %892 = vmatpush.msra.mxu0 0.0
        %893 = vmatpush.msra.mxu0 0.0
        %894 = vmatpush.msra.mxu0 0.0
        %895 = vmatpush.msra.mxu0 0.0
        %896 = vmatpush.msra.mxu0 0.0
        %897 = vmatpush.msra.mxu0 0.0
        %898 = vmatpush.msra.mxu0 0.0
        %899 = vmatpush.msra.mxu0 0.0
        %900 = vmatpush.msra.mxu0 0.0
        %901 = vmatpush.msra.mxu0 0.0
        %902 = vmatpush.msra.mxu0 0.0
        %903 = vmatpush.msra.mxu0 %v626
        %904 = vmatpush.msra.mxu0 %v625
        %905 = vmatpush.msra.mxu0 %v624
        %906 = vmatpush.msra.mxu0 %v623
        %907 = vmatmul.f32.gmra.mxu0 %v661
        %v908 = vpop.f32.mrf.mxu0
        %v909 = vadd.f32 %v845, %v908
        %910 = vdwg.mxu0
        %911 = vmatpush.msra.mxu0 0.0
        %912 = vmatpush.msra.mxu0 0.0
        %913 = vmatpush.msra.mxu0 0.0
        %914 = vmatpush.msra.mxu0 0.0
        %915 = vmatpush.msra.mxu0 0.0
        %916 = vmatpush.msra.mxu0 0.0
        %917 = vmatpush.msra.mxu0 0.0
        %918 = vmatpush.msra.mxu0 0.0
        %919 = vmatpush.msra.mxu0 0.0
        %920 = vmatpush.msra.mxu0 0.0
        %921 = vmatpush.msra.mxu0 0.0
        %922 = vmatpush.msra.mxu0 0.0
        %923 = vmatpush.msra.mxu0 %v630
        %924 = vmatpush.msra.mxu0 %v629
        %925 = vmatpush.msra.mxu0 %v628
        %926 = vmatpush.msra.mxu0 %v627
        %927 = vmatmul.f32.gmra.mxu0 %v661
        %v928 = vpop.f32.mrf.mxu0
        %v929 = vadd.f32 %v846, %v928
        %930 = vdwg.mxu0
        %vm931 = vcmask 64512
        %v933 = vsel %vm931, %v743, 0
        %v936 = vsel %vm931, %v777, 0
        %938 = vmatpush.xpose.msra.mxu0 0.0
        %939 = vmatpush.xpose.msra.mxu0 0.0
        %940 = vmatpush.xpose.msra.mxu0 0.0
        %941 = vmatpush.xpose.msra.mxu0 0.0
        %942 = vmatpush.xpose.msra.mxu0 0.0
        %943 = vmatpush.xpose.msra.mxu0 0.0
        %944 = vmatpush.xpose.msra.mxu0 0.0
        %945 = vmatpush.xpose.msra.mxu0 0.0
        %946 = vmatpush.xpose.msra.mxu0 0.0
        %947 = vmatpush.xpose.msra.mxu0 0.0
        %948 = vmatpush.xpose.msra.mxu0 0.0
        %949 = vmatpush.xpose.msra.mxu0 0.0
        %950 = vmatpush.xpose.msra.mxu0 0.0
        %951 = vmatpush.xpose.msra.mxu0 0.0
        %952 = vmatpush.xpose.msra.mxu0 0.0
        %953 = vmatpush.xpose.msra.mxu0 %v936
        %954 = vmatmul.f32.gmra.mxu0 %v933
        %v955 = vpop.f32.mrf.mxu0
        %v956 = vadd.f32 0.0, %v955
        %957 = vdwg.mxu0
        %v959 = vsel %vm931, %v744, 0
        %v962 = vsel %vm931, %v797, 0
        %964 = vmatpush.xpose.msra.mxu0 0.0
        %965 = vmatpush.xpose.msra.mxu0 0.0
        %966 = vmatpush.xpose.msra.mxu0 0.0
        %967 = vmatpush.xpose.msra.mxu0 0.0
        %968 = vmatpush.xpose.msra.mxu0 0.0
        %969 = vmatpush.xpose.msra.mxu0 0.0
        %970 = vmatpush.xpose.msra.mxu0 0.0
        %971 = vmatpush.xpose.msra.mxu0 0.0
        %972 = vmatpush.xpose.msra.mxu0 0.0
        %973 = vmatpush.xpose.msra.mxu0 0.0
        %974 = vmatpush.xpose.msra.mxu0 0.0
        %975 = vmatpush.xpose.msra.mxu0 0.0
        %976 = vmatpush.xpose.msra.mxu0 0.0
        %977 = vmatpush.xpose.msra.mxu0 0.0
        %978 = vmatpush.xpose.msra.mxu0 0.0
        %979 = vmatpush.xpose.msra.mxu0 %v962
        %980 = vmatmul.f32.gmra.mxu0 %v959
        %v981 = vpop.f32.mrf.mxu0
        %v982 = vadd.f32 0.0, %v981
        %983 = vdwg.mxu0
        %v985 = vsel %vm931, %v745, 0
        %v988 = vsel %vm931, %v817, 0
        %990 = vmatpush.xpose.msra.mxu0 0.0
        %991 = vmatpush.xpose.msra.mxu0 0.0
        %992 = vmatpush.xpose.msra.mxu0 0.0
        %993 = vmatpush.xpose.msra.mxu0 0.0
        %994 = vmatpush.xpose.msra.mxu0 0.0
        %995 = vmatpush.xpose.msra.mxu0 0.0
        %996 = vmatpush.xpose.msra.mxu0 0.0
        %997 = vmatpush.xpose.msra.mxu0 0.0
        %998 = vmatpush.xpose.msra.mxu0 0.0
        %999 = vmatpush.xpose.msra.mxu0 0.0
        %1000 = vmatpush.xpose.msra.mxu0 0.0
        %1001 = vmatpush.xpose.msra.mxu0 0.0
        %1002 = vmatpush.xpose.msra.mxu0 0.0
        %1003 = vmatpush.xpose.msra.mxu0 0.0
        %1004 = vmatpush.xpose.msra.mxu0 0.0
        %1005 = vmatpush.xpose.msra.mxu0 %v988
        %1006 = vmatmul.f32.gmra.mxu0 %v985
        %v1007 = vpop.f32.mrf.mxu0
        %v1008 = vadd.f32 0.0, %v1007
        %1009 = vdwg.mxu0
        %v1011 = vsel %vm931, %v746, 0
        %v1014 = vsel %vm931, %v837, 0
        %1016 = vmatpush.xpose.msra.mxu0 0.0
        %1017 = vmatpush.xpose.msra.mxu0 0.0
        %1018 = vmatpush.xpose.msra.mxu0 0.0
        %1019 = vmatpush.xpose.msra.mxu0 0.0
        %1020 = vmatpush.xpose.msra.mxu0 0.0
        %1021 = vmatpush.xpose.msra.mxu0 0.0
        %1022 = vmatpush.xpose.msra.mxu0 0.0
        %1023 = vmatpush.xpose.msra.mxu0 0.0
        %1024 = vmatpush.xpose.msra.mxu0 0.0
        %1025 = vmatpush.xpose.msra.mxu0 0.0
        %1026 = vmatpush.xpose.msra.mxu0 0.0
        %1027 = vmatpush.xpose.msra.mxu0 0.0
        %1028 = vmatpush.xpose.msra.mxu0 0.0
        %1029 = vmatpush.xpose.msra.mxu0 0.0
        %1030 = vmatpush.xpose.msra.mxu0 0.0
        %1031 = vmatpush.xpose.msra.mxu0 %v1014
        %1032 = vmatmul.f32.gmra.mxu0 %v1011
        %v1033 = vpop.f32.mrf.mxu0
        %v1034 = vadd.f32 0.0, %v1033
        %1035 = vdwg.mxu0
        %v1036 = vsel %vm931, %v956, -inf
        %1037 = vmax.xlane.f32.xlu0 %v1036
        %v1038 = vpop.xlane.xlu0 %1037
        %v1039 = vsel %vm931, %v982, -inf
        %1040 = vmax.xlane.f32.xlu0 %v1039
        %v1041 = vpop.xlane.xlu0 %1040
        %v1042 = vsel %vm931, %v1008, -inf
        %1043 = vmax.xlane.f32.xlu0 %v1042
        %v1044 = vpop.xlane.xlu0 %1043
        %v1045 = vsel %vm931, %v1034, -inf
        %1046 = vmax.xlane.f32.xlu0 %v1045
        %v1047 = vpop.xlane.xlu0 %1046
        %v1048 = vsub.f32 %v956, %v1038
        %v1049 = vsub.f32 %v982, %v1041
        %v1050 = vsub.f32 %v1008, %v1044
        %v1051 = vsub.f32 %v1034, %v1047
        %v1052 = vmul.f32 %v1048, 1.442695
        %v1053 = vpow.pop %v1052
        %v1054 = vmul.f32 %v1049, 1.442695
        %v1055 = vpow.pop %v1054
        %v1056 = vmul.f32 %v1050, 1.442695
        %v1057 = vpow.pop %v1056
        %v1058 = vmul.f32 %v1051, 1.442695
        %v1059 = vpow.pop %v1058
        %v1060 = vsel %vm931, %v1053, 0.0
        %1061 = vadd.xlane.f32.xlu0 %v1060
        %v1062 = vpop.xlane.xlu0 %1061
        %v1063 = vsel %vm931, %v1055, 0.0
        %1064 = vadd.xlane.f32.xlu0 %v1063
        %v1065 = vpop.xlane.xlu0 %1064
        %v1066 = vsel %vm931, %v1057, 0.0
        %1067 = vadd.xlane.f32.xlu0 %v1066
        %v1068 = vpop.xlane.xlu0 %1067
        %v1069 = vsel %vm931, %v1059, 0.0
        %1070 = vadd.xlane.f32.xlu0 %v1069
        %v1071 = vpop.xlane.xlu0 %1070
        %v1072 = vrcp.pop %v1062
        %v1073 = vrcp.pop %v1065
        %v1074 = vrcp.pop %v1068
        %v1075 = vrcp.pop %v1071
        %v1076 = vmul.f32 %v1062, %v1072
        %v1077 = vmul.f32 %v1065, %v1073
        %v1078 = vmul.f32 %v1068, %v1074
        %v1079 = vmul.f32 %v1071, %v1075
        %v1080 = vsub.f32 2.0, %v1076
        %v1081 = vsub.f32 2.0, %v1077
        %v1082 = vsub.f32 2.0, %v1078
        %v1083 = vsub.f32 2.0, %v1079
        %v1084 = vmul.f32 %v1072, %v1080
        %v1085 = vmul.f32 %v1073, %v1081
        %v1086 = vmul.f32 %v1074, %v1082
        %v1087 = vmul.f32 %v1075, %v1083
        %v1088 = vmul.f32 %v1053, %v1084
        %v1089 = vmul.f32 %v1055, %v1085
        %v1090 = vmul.f32 %v1057, %v1086
        %v1091 = vmul.f32 %v1059, %v1087
        %1092 = vst.msk [vmem:[%s577] sm:$0xff] %vm931, %v1088
        %1093 = vst.msk [vmem:[%s577 + $0x8] sm:$0xff] %vm931, %v1089
        %1094 = vst.msk [vmem:[%s577 + $0x10] sm:$0xff] %vm931, %v1090
        %1095 = vst.msk [vmem:[%s577 + $0x18] sm:$0xff] %vm931, %v1091
        %v1097 = vsel %vm931, %v1088, 0
        %1099 = vmatpush.msra.mxu0 0.0
        %1100 = vmatpush.msra.mxu0 0.0
        %1101 = vmatpush.msra.mxu0 0.0
        %1102 = vmatpush.msra.mxu0 0.0
        %1103 = vmatpush.msra.mxu0 0.0
        %1104 = vmatpush.msra.mxu0 0.0
        %1105 = vmatpush.msra.mxu0 0.0
        %1106 = vmatpush.msra.mxu0 0.0
        %1107 = vmatpush.msra.mxu0 0.0
        %1108 = vmatpush.msra.mxu0 0.0
        %1109 = vmatpush.msra.mxu0 0.0
        %1110 = vmatpush.msra.mxu0 0.0
        %1111 = vmatpush.msra.mxu0 0.0
        %1112 = vmatpush.msra.mxu0 0.0
        %1113 = vmatpush.msra.mxu0 0.0
        %1114 = vmatpush.msra.mxu0 %v869
        %1115 = vmatmul.f32.gmra.mxu0 %v1097
        %v1116 = vpop.f32.mrf.mxu0
        %v1117 = vadd.f32 0.0, %v1116
        %1118 = vdwg.mxu0
        %v1120 = vsel %vm931, %v1089, 0
        %1122 = vmatpush.msra.mxu0 0.0
        %1123 = vmatpush.msra.mxu0 0.0
        %1124 = vmatpush.msra.mxu0 0.0
        %1125 = vmatpush.msra.mxu0 0.0
        %1126 = vmatpush.msra.mxu0 0.0
        %1127 = vmatpush.msra.mxu0 0.0
        %1128 = vmatpush.msra.mxu0 0.0
        %1129 = vmatpush.msra.mxu0 0.0
        %1130 = vmatpush.msra.mxu0 0.0
        %1131 = vmatpush.msra.mxu0 0.0
        %1132 = vmatpush.msra.mxu0 0.0
        %1133 = vmatpush.msra.mxu0 0.0
        %1134 = vmatpush.msra.mxu0 0.0
        %1135 = vmatpush.msra.mxu0 0.0
        %1136 = vmatpush.msra.mxu0 0.0
        %1137 = vmatpush.msra.mxu0 %v889
        %1138 = vmatmul.f32.gmra.mxu0 %v1120
        %v1139 = vpop.f32.mrf.mxu0
        %v1140 = vadd.f32 0.0, %v1139
        %1141 = vdwg.mxu0
        %v1143 = vsel %vm931, %v1090, 0
        %1145 = vmatpush.msra.mxu0 0.0
        %1146 = vmatpush.msra.mxu0 0.0
        %1147 = vmatpush.msra.mxu0 0.0
        %1148 = vmatpush.msra.mxu0 0.0
        %1149 = vmatpush.msra.mxu0 0.0
        %1150 = vmatpush.msra.mxu0 0.0
        %1151 = vmatpush.msra.mxu0 0.0
        %1152 = vmatpush.msra.mxu0 0.0
        %1153 = vmatpush.msra.mxu0 0.0
        %1154 = vmatpush.msra.mxu0 0.0
        %1155 = vmatpush.msra.mxu0 0.0
        %1156 = vmatpush.msra.mxu0 0.0
        %1157 = vmatpush.msra.mxu0 0.0
        %1158 = vmatpush.msra.mxu0 0.0
        %1159 = vmatpush.msra.mxu0 0.0
        %1160 = vmatpush.msra.mxu0 %v909
        %1161 = vmatmul.f32.gmra.mxu0 %v1143
        %v1162 = vpop.f32.mrf.mxu0
        %v1163 = vadd.f32 0.0, %v1162
        %1164 = vdwg.mxu0
        %v1166 = vsel %vm931, %v1091, 0
        %1168 = vmatpush.msra.mxu0 0.0
        %1169 = vmatpush.msra.mxu0 0.0
        %1170 = vmatpush.msra.mxu0 0.0
        %1171 = vmatpush.msra.mxu0 0.0
        %1172 = vmatpush.msra.mxu0 0.0
        %1173 = vmatpush.msra.mxu0 0.0
        %1174 = vmatpush.msra.mxu0 0.0
        %1175 = vmatpush.msra.mxu0 0.0
        %1176 = vmatpush.msra.mxu0 0.0
        %1177 = vmatpush.msra.mxu0 0.0
        %1178 = vmatpush.msra.mxu0 0.0
        %1179 = vmatpush.msra.mxu0 0.0
        %1180 = vmatpush.msra.mxu0 0.0
        %1181 = vmatpush.msra.mxu0 0.0
        %1182 = vmatpush.msra.mxu0 0.0
        %1183 = vmatpush.msra.mxu0 %v929
        %1184 = vmatmul.f32.gmra.mxu0 %v1166
        %v1185 = vpop.f32.mrf.mxu0
        %v1186 = vadd.f32 0.0, %v1185
        %1187 = vdwg.mxu0
        %v1189 = vsel %vm931, %v1117, 0
        %1191 = vmatpush.msra.mxu0 0.0
        %1192 = vmatpush.msra.mxu0 0.0
        %1193 = vmatpush.msra.mxu0 0.0
        %1194 = vmatpush.msra.mxu0 0.0
        %1195 = vmatpush.msra.mxu0 0.0
        %1196 = vmatpush.msra.mxu0 0.0
        %1197 = vmatpush.msra.mxu0 0.0
        %1198 = vmatpush.msra.mxu0 0.0
        %1199 = vmatpush.msra.mxu0 0.0
        %1200 = vmatpush.msra.mxu0 0.0
        %1201 = vmatpush.msra.mxu0 0.0
        %1202 = vmatpush.msra.mxu0 0.0
        %1203 = vmatpush.msra.mxu0 0.0
        %1204 = vmatpush.msra.mxu0 0.0
        %1205 = vmatpush.msra.mxu0 0.0
        %1206 = vmatpush.msra.mxu0 %v631
        %1207 = vmatmul.f32.gmra.mxu0 %v1189
        %v1208 = vpop.f32.mrf.mxu0
        %v1209 = vadd.f32 0.0, %v1208
        %1210 = vdwg.mxu0
        %v1212 = vsel %vm931, %v1140, 0
        %1214 = vmatpush.msra.mxu0 0.0
        %1215 = vmatpush.msra.mxu0 0.0
        %1216 = vmatpush.msra.mxu0 0.0
        %1217 = vmatpush.msra.mxu0 0.0
        %1218 = vmatpush.msra.mxu0 0.0
        %1219 = vmatpush.msra.mxu0 0.0
        %1220 = vmatpush.msra.mxu0 0.0
        %1221 = vmatpush.msra.mxu0 0.0
        %1222 = vmatpush.msra.mxu0 0.0
        %1223 = vmatpush.msra.mxu0 0.0
        %1224 = vmatpush.msra.mxu0 0.0
        %1225 = vmatpush.msra.mxu0 0.0
        %1226 = vmatpush.msra.mxu0 0.0
        %1227 = vmatpush.msra.mxu0 0.0
        %1228 = vmatpush.msra.mxu0 0.0
        %1229 = vmatpush.msra.mxu0 %v632
        %1230 = vmatmul.f32.gmra.mxu0 %v1212
        %v1231 = vpop.f32.mrf.mxu0
        %v1232 = vadd.f32 0.0, %v1231
        %1233 = vdwg.mxu0
        %v1235 = vsel %vm931, %v1163, 0
        %1237 = vmatpush.msra.mxu0 0.0
        %1238 = vmatpush.msra.mxu0 0.0
        %1239 = vmatpush.msra.mxu0 0.0
        %1240 = vmatpush.msra.mxu0 0.0
        %1241 = vmatpush.msra.mxu0 0.0
        %1242 = vmatpush.msra.mxu0 0.0
        %1243 = vmatpush.msra.mxu0 0.0
        %1244 = vmatpush.msra.mxu0 0.0
        %1245 = vmatpush.msra.mxu0 0.0
        %1246 = vmatpush.msra.mxu0 0.0
        %1247 = vmatpush.msra.mxu0 0.0
        %1248 = vmatpush.msra.mxu0 0.0
        %1249 = vmatpush.msra.mxu0 0.0
        %1250 = vmatpush.msra.mxu0 0.0
        %1251 = vmatpush.msra.mxu0 0.0
        %1252 = vmatpush.msra.mxu0 %v633
        %1253 = vmatmul.f32.gmra.mxu0 %v1235
        %v1254 = vpop.f32.mrf.mxu0
        %v1255 = vadd.f32 0.0, %v1254
        %1256 = vdwg.mxu0
        %v1258 = vsel %vm931, %v1186, 0
        %1260 = vmatpush.msra.mxu0 0.0
        %1261 = vmatpush.msra.mxu0 0.0
        %1262 = vmatpush.msra.mxu0 0.0
        %1263 = vmatpush.msra.mxu0 0.0
        %1264 = vmatpush.msra.mxu0 0.0
        %1265 = vmatpush.msra.mxu0 0.0
        %1266 = vmatpush.msra.mxu0 0.0
        %1267 = vmatpush.msra.mxu0 0.0
        %1268 = vmatpush.msra.mxu0 0.0
        %1269 = vmatpush.msra.mxu0 0.0
        %1270 = vmatpush.msra.mxu0 0.0
        %1271 = vmatpush.msra.mxu0 0.0
        %1272 = vmatpush.msra.mxu0 0.0
        %1273 = vmatpush.msra.mxu0 0.0
        %1274 = vmatpush.msra.mxu0 0.0
        %1275 = vmatpush.msra.mxu0 %v634
        %1276 = vmatmul.f32.gmra.mxu0 %v1258
        %v1277 = vpop.f32.mrf.mxu0
        %v1278 = vadd.f32 0.0, %v1277
        %1279 = vdwg.mxu0
        %v1280 = vsel %vm659, %v1209, 0.0
        %v1281 = vsel %vm659, %v1232, 0.0
        %v1282 = vadd.f32 %v1280, %v1281
        %v1283 = vsel %vm659, %v1255, 0.0
        %v1284 = vadd.f32 %v1282, %v1283
        %v1285 = vsel %vm659, %v1278, 0.0
        %v1286 = vadd.f32 %v1284, %v1285
        %v1287 = vld [vmem:[%s8] sm:$0x1]
        %v1289 = vperm.slane %v1287, 0
        %v1291 = vadd.f32 %v1286, %v1289
        %v1292 = vadd.f32 %v582, %v1291
        %v1293 = vld [vmem:[%s9] sm:$0x1]
        %v1294 = vld [vmem:[%s10] sm:$0x1]
        %v1295 = vsel %vm659, %v1292, 0.0
        %1296 = vadd.xlane.f32.xlu0 %v1295
        %v1297 = vpop.xlane.xlu0 %1296
        %v1298 = vrcp.pop 32.0
        %v1299 = vmul.f32 32.0, %v1298
        %v1300 = vsub.f32 1.0, %v1299
        %v1301 = vmul.f32 %v1298, %v1300
        %v1302 = vadd.f32 %v1298, %v1301
        %vm1303 = vweird.f32 %v1298
        %v1304 = vsel %vm1303, %v1298, %v1302
        %v1305 = vmul.f32 %v1297, %v1304
        %v1306 = vsub.f32 %v1292, %v1305
        %v1307 = vmul.f32 %v1306, %v1306
        %v1308 = vsel %vm659, %v1307, 0.0
        %1309 = vadd.xlane.f32.xlu0 %v1308
        %v1310 = vpop.xlane.xlu0 %1309
        %v1311 = vmul.f32 %v1310, %v1304
        %v1312 = vadd.f32 %v1311, 1e-05
        %v1313 = vrsqrt.pop %v1312
        %v1314 = vmul.f32 %v1313, %v1312
        %v1315 = vmul.f32 %v1314, %v1313
        %v1316 = vmul.f32 0.5, %v1315
        %v1317 = vsub.f32 1.5, %v1316
        %v1318 = vmul.f32 %v1313, %v1317
        %vm1319 = vweird.f32 %v1312
        %vm1320 = vweird.f32 %v1313
        %vm1321 = vmor %vm1319, %vm1320
        %v1322 = vsel %vm1321, %v1313, %v1318
        %v1323 = vmul.f32 %v1306, %v1322
        %v1325 = vperm.slane %v1293, 0
        %v1327 = vmul.f32 %v1323, %v1325
        %v1329 = vperm.slane %v1294, 0
        %v1331 = vadd.f32 %v1327, %v1329
        %v1332 = vld [vmem:[%s11] sm:$0xff]
        %v1333 = vld [vmem:[%s11 + $0x8] sm:$0xff]
        %v1334 = vld [vmem:[%s11 + $0x10] sm:$0xff]
        %v1335 = vld [vmem:[%s11 + $0x18] sm:$0xff]
        %v1336 = vld [vmem:[%s12] sm:$0x1]
        %v1338 = vperm.slane %v1336, 0
        %v1341 = vsel %vm659, %v1331, 0
        %1343 = vmatpush.msra.mxu0 0.0
        %1344 = vmatpush.msra.mxu0 0.0
        %1345 = vmatpush.msra.mxu0 0.0
        %1346 = vmatpush.msra.mxu0 0.0
        %1347 = vmatpush.msra.mxu0 0.0
        %1348 = vmatpush.msra.mxu0 0.0
        %1349 = vmatpush.msra.mxu0 0.0
        %1350 = vmatpush.msra.mxu0 0.0
        %1351 = vmatpush.msra.mxu0 0.0
        %1352 = vmatpush.msra.mxu0 0.0
        %1353 = vmatpush.msra.mxu0 0.0
        %1354 = vmatpush.msra.mxu0 0.0
        %1355 = vmatpush.msra.mxu0 %v1335
        %1356 = vmatpush.msra.mxu0 %v1334
        %1357 = vmatpush.msra.mxu0 %v1333
        %1358 = vmatpush.msra.mxu0 %v1332
        %1359 = vmatmul.f32.gmra.mxu0 %v1341
        %v1360 = vpop.f32.mrf.mxu0
        %v1361 = vadd.f32 %v1338, %v1360
        %1362 = vdwg.mxu0
        %v1363 = vmax.f32 %v1361, 0.0
        %v1364 = vld [vmem:[%s13] sm:$0xff]
        %v1365 = vld [vmem:[%s13 + $0x8] sm:$0xff]
        %v1366 = vld [vmem:[%s13 + $0x10] sm:$0xff]
        %v1367 = vld [vmem:[%s13 + $0x18] sm:$0xff]
        %v1368 = vld [vmem:[%s13 + $0x20] sm:$0xff]
        %v1369 = vld [vmem:[%s13 + $0x28] sm:$0xff]
        %v1370 = vld [vmem:[%s13 + $0x30] sm:$0xff]
        %v1371 = vld [vmem:[%s13 + $0x38] sm:$0xff]
        %v1372 = vld [vmem:[%s14] sm:$0x1]
        %v1374 = vperm.slane %v1372, 0
        %vm1376 = vcmask 523264
        %v1378 = vsel %vm1376, %v1363, 0
        %1380 = vmatpush.msra.mxu0 0.0
        %1381 = vmatpush.msra.mxu0 0.0
        %1382 = vmatpush.msra.mxu0 0.0
        %1383 = vmatpush.msra.mxu0 0.0
        %1384 = vmatpush.msra.mxu0 0.0
        %1385 = vmatpush.msra.mxu0 0.0
        %1386 = vmatpush.msra.mxu0 0.0
        %1387 = vmatpush.msra.mxu0 0.0
        %1388 = vmatpush.msra.mxu0 %v1371
        %1389 = vmatpush.msra.mxu0 %v1370
        %1390 = vmatpush.msra.mxu0 %v1369
        %1391 = vmatpush.msra.mxu0 %v1368
        %1392 = vmatpush.msra.mxu0 %v1367
        %1393 = vmatpush.msra.mxu0 %v1366
        %1394 = vmatpush.msra.mxu0 %v1365
        %1395 = vmatpush.msra.mxu0 %v1364
        %1396 = vmatmul.f32.gmra.mxu0 %v1378
        %v1397 = vpop.f32.mrf.mxu0
        %v1398 = vadd.f32 %v1374, %v1397
        %1399 = vdwg.mxu0
        %v1400 = vadd.f32 %v1331, %v1398
        %v1401 = vld [vmem:[%s15] sm:$0x1]
        %v1402 = vld [vmem:[%s16] sm:$0x1]
        %v1403 = vsel %vm659, %v1400, 0.0
        %1404 = vadd.xlane.f32.xlu0 %v1403
        %v1405 = vpop.xlane.xlu0 %1404
        %v1406 = vmul.f32 %v1405, %v1304
        %v1407 = vsub.f32 %v1400, %v1406
        %v1408 = vmul.f32 %v1407, %v1407
        %v1409 = vsel %vm659, %v1408, 0.0
        %1410 = vadd.xlane.f32.xlu0 %v1409
        %v1411 = vpop.xlane.xlu0 %1410
        %v1412 = vmul.f32 %v1411, %v1304
        %v1413 = vadd.f32 %v1412, 1e-05
        %v1414 = vrsqrt.pop %v1413
        %v1415 = vmul.f32 %v1414, %v1413
        %v1416 = vmul.f32 %v1415, %v1414
        %v1417 = vmul.f32 0.5, %v1416
        %v1418 = vsub.f32 1.5, %v1417
        %v1419 = vmul.f32 %v1414, %v1418
        %vm1420 = vweird.f32 %v1413
        %vm1421 = vweird.f32 %v1414
        %vm1422 = vmor %vm1420, %vm1421
        %v1423 = vsel %vm1422, %v1414, %v1419
        %v1424 = vmul.f32 %v1407, %v1423
        %v1426 = vperm.slane %v1401, 0
        %v1428 = vmul.f32 %v1424, %v1426
        %v1430 = vperm.slane %v1402, 0
        %v1432 = vadd.f32 %v1428, %v1430
        %1433 = vst.msk [vmem:[%s570] sm:$0xff] %vm659, %v1432
        %s1434 = sand.u32 %s406, 1
        %s1435 = scalar_lea.sflag [#allocation3], %s1434
        %s1436 = sand.u32 %s406, 1
        %s1437 = smul.addr %s1436, 8
        %s1438 = scalar_lea.vmem [#allocation2], %s1437
        %s1439 = sand.u32 %s432, 1
        %s1440 = scalar_lea.sflag [#allocation5], %s1439
        %s1441 = sand.u32 %s432, 1
        %s1442 = smul.addr %s1441, 32
        %s1443 = scalar_lea.vmem [#allocation4], %s1442
        // Predicated region
        $region89: #{tpu_custom_call.1} parent=87 // pred_check
          %p1444 = pneg %p416
        $region90: #{tpu_custom_call.1} parent=87 // pred_check_branch
          %1446 = sbr.rel (%p1444) target = $region92
        $region91: #{tpu_custom_call.1} parent=87 // pred_region
          %1448 = vsyncadd %s1435, 0
          %s1449 = smul.addr %s36, 8
          %s1450 = scalar_lea.hbm %s17, %s1449
          %s1452 = sshll.u32 %s1438, 4
          %s1453 = int_to_ptr.vmem [resolvable:$true] %s1452
          %s1454 = sshll.u32 %s1450, 4
          %s1455 = int_to_ptr.hbm [resolvable:$true] %s1454
          %1457 = dma.vmem_to_hbm [thread:$0]  %s1453, 128, %s1455, %s1435
        $region92: #{tpu_custom_call.1} parent=87 // pred_fallthru
          _
        // Predicated region
        $region93: #{tpu_custom_call.1} parent=87 // pred_check
          %p1458 = pneg %p442
        $region94: #{tpu_custom_call.1} parent=87 // pred_check_branch
          %1460 = sbr.rel (%p1458) target = $region96
        $region95: #{tpu_custom_call.1} parent=87 // pred_region
          %1462 = vsyncadd %s1440, 0
          %s1463 = smul.addr %s36, 4
          %s1464 = smul.addr %s1463, 8
          %s1465 = scalar_lea.hbm %s18, %s1464
          %s1466 = sshll.u32 %s1443, 4
          %s1467 = int_to_ptr.vmem [resolvable:$true] %s1466
          %s1468 = sshll.u32 %s1465, 4
          %s1469 = int_to_ptr.hbm [resolvable:$true] %s1468
          %1474 = dma.vmem_to_hbm [thread:$0]  %s1467, 512, %s1469, %s1440, 128, 128, 8
        $region96: #{tpu_custom_call.1} parent=87 // pred_fallthru
          _
      $region88: #{tpu_custom_call.1} parent=5 // pred_fallthru
        _
      %p1475 = scmp.le.s32.totalorder 2, %s31
      // Predicated region
      $region97: #{tpu_custom_call.1} parent=5 // pred_check
        %p1476 = pneg %p1475
      $region98: #{tpu_custom_call.1} parent=5 // pred_check_branch
        %1478 = sbr.rel (%p1476) target = $region100
      $region99: #{tpu_custom_call.1} parent=5 // pred_region
        %s1479 = ssub.s32 %s31, 2
        // Predicated region
        $region101: #{tpu_custom_call.1} parent=99 // pred_check
          %p1480 = pneg %p422
        $region102: #{tpu_custom_call.1} parent=99 // pred_check_branch
          %1482 = sbr.rel (%p1480) target = $region104
        $region103: #{tpu_custom_call.1} parent=99 // pred_region
          %s1483 = sand.u32 %s407, 1
          %s1484 = scalar_lea.sflag [#allocation3], %s1483
          %s1485 = sand.u32 %s407, 1
          %s1486 = smul.addr %s1485, 8
          %s1487 = scalar_lea.vmem [#allocation2], %s1486
          %1489 = dma.done %s1484, 128
        $region104: #{tpu_custom_call.1} parent=99 // pred_fallthru
          _
        // Predicated region
        $region105: #{tpu_custom_call.1} parent=99 // pred_check
          %p1490 = pneg %p448
        $region106: #{tpu_custom_call.1} parent=99 // pred_check_branch
          %1492 = sbr.rel (%p1490) target = $region108
        $region107: #{tpu_custom_call.1} parent=99 // pred_region
          %s1493 = sand.u32 %s433, 1
          %s1494 = scalar_lea.sflag [#allocation5], %s1493
          %s1495 = sand.u32 %s433, 1
          %s1496 = smul.addr %s1495, 32
          %s1497 = scalar_lea.vmem [#allocation4], %s1496
          %1499 = dma.done %s1494, 512
        $region108: #{tpu_custom_call.1} parent=99 // pred_fallthru
          _
      $region100: #{tpu_custom_call.1} parent=5 // pred_fallthru
        _
    $region6: #{tpu_custom_call.1} parent=1 // loop_footer
      %s35 = sadd.s32 1, %s31
    $region7: #{tpu_custom_call.1} parent=1 // loop_footer_branch
      %30 = sbr.rel target = $region3
    $region8: #{tpu_custom_call.1} parent=1 // loop_exit
      _
    %1500 = vsyncpa [#allocation3], 1
    %s1501 = scalar_lea.sflag [#allocation3], 1
    %1502 = vsyncpa %s1501, 1
    %1503 = vsyncpa [#allocation5], 1
    %s1504 = scalar_lea.sflag [#allocation5], 1
    %1505 = vsyncpa %s1504, 1

</llo_original>
